<compile_context>
chip_gen: v6e
topology: v6e:2x2x1
jax: 0.10.0
libtpu: 0.0.40
codegen_flags: <defaults>
</compile_context>

<pallas_src>
import functools

import jax
import jax.numpy as jnp
from jax.experimental import pallas as pl
from jax.experimental.pallas import tpu as pltpu


def mha_kernel(q_ref, k_ref, v_ref,
               wq_ref, bq_ref, wk_ref, bk_ref, wv_ref, bv_ref,
               wo_ref, bo_ref,
               o_ref,
               qh_ref, kh_ref, vh_ref, outh_ref,
               *, num_heads, head_dim, s_tile):
    cdt = qh_ref.dtype                        # MXU compute dtype (bf16 in prod)
    b_blk, T, D = q_ref.shape
    S = k_ref.shape[1]
    Dh = qh_ref.shape[-1]
    n_kv = S // s_tile

    # ---- fused full-width Q/K/V projections (Q scale folded into wq/bq). ----
    # (b_blk*T, D) @ (D, Dh): fills MXU rows better than per-batch M=T matmuls.
    q2 = q_ref[...].reshape(b_blk * T, D)
    k2 = k_ref[...].reshape(b_blk * S, D)
    v2 = v_ref[...].reshape(b_blk * S, D)
    qh_ref[...] = (jnp.dot(q2, wq_ref[...], preferred_element_type=jnp.float32)
                   + bq_ref[...]).astype(cdt).reshape(b_blk, T, Dh)
    kh_ref[...] = (jnp.dot(k2, wk_ref[...], preferred_element_type=jnp.float32)
                   + bk_ref[...]).astype(cdt).reshape(b_blk, S, Dh)
    vh_ref[...] = (jnp.dot(v2, wv_ref[...], preferred_element_type=jnp.float32)
                   + bv_ref[...]).astype(cdt).reshape(b_blk, S, Dh)

    # ---- per-head attention: fori_loop over heads bounds the live set; ------
    # ---- flash-style online softmax over KV tiles inside each head. ---------
    def head_body(h, carry):
        lo = pl.multiple_of(h * head_dim, head_dim)        # lane-tile aligned
        qh_h = qh_ref[:, :, pl.ds(lo, head_dim)]           # (b_blk, T, hd)

        def kv_body(s, mlacc):
            m, l, acc = mlacc
            so = pl.multiple_of(s * s_tile, s_tile)
            kh_t = kh_ref[:, pl.ds(so, s_tile), pl.ds(lo, head_dim)]
            vh_t = vh_ref[:, pl.ds(so, s_tile), pl.ds(lo, head_dim)]
            # QK^T, contracting last dims directly (no in-kernel transpose).
            logits = jnp.einsum('btd,bsd->bts', qh_h, kh_t,
                                preferred_element_type=jnp.float32)
            m_new = jnp.maximum(m, logits.max(axis=-1, keepdims=True))
            alpha = jnp.exp(m - m_new)                     # (b_blk, T, 1) f32
            # exp in the compute dtype (bf16 EUP on v6e/v7x; exact for f32).
            p = jnp.exp((logits - m_new).astype(cdt))      # (b_blk, T, s_tile)
            l_new = alpha * l + jnp.sum(p, axis=-1, keepdims=True,
                                        dtype=jnp.float32)
            pv = jnp.einsum('bts,bsd->btd', p, vh_t,
                            preferred_element_type=jnp.float32)
            acc_new = alpha * acc + pv                     # f32 accumulation
            return m_new, l_new, acc_new

        m0 = jnp.full((b_blk, T, 1), -jnp.inf, jnp.float32)
        l0 = jnp.zeros((b_blk, T, 1), jnp.float32)
        acc0 = jnp.zeros((b_blk, T, head_dim), jnp.float32)
        m, l, acc = jax.lax.fori_loop(0, n_kv, kv_body, (m0, l0, acc0))

        # Normalize AFTER the PV matmul: (T, hd) multiplies instead of (T, S).
        outh_ref[:, :, pl.ds(lo, head_dim)] = (acc * (1.0 / l)).astype(cdt)
        return carry

    jax.lax.fori_loop(0, num_heads, head_body, 0)

    # ---- single MXU-efficient (b_blk*T, Dh) @ (Dh, D) output projection. ----
    outh2 = outh_ref[...].reshape(b_blk * T, Dh)
    out = (jnp.dot(outh2, wo_ref[...], preferred_element_type=jnp.float32)
           + bo_ref[...])
    o_ref[...] = out.reshape(b_blk, T, D).astype(o_ref.dtype)


def _pick_batch_block(B, T, target_rows=256):
    """Batch elements per grid step: fill ~256 MXU rows but keep >=2 grid steps."""
    bb = max(1, min(B, max(1, target_rows // max(T, 1))))
    while bb > 1 and B % bb != 0:
        bb -= 1
    while bb > 1 and (B // bb) < 2:            # leave work for both v7x TCs
        bb = max(1, bb // 2)
        while bb > 1 and B % bb != 0:
            bb -= 1
    return bb


def _pick_kv_tile(S, max_tile=512):
    """KV tile for the online-softmax loop."""
    if S <= max_tile:
        return S
    for t in range(max_tile, 0, -1):
        if t % 128 == 0 and S % t == 0:
            return t
    # TODO(synk): pad/mask for ragged S; fall back to a single full-S tile.
    return S


def _vmem_limit_bytes(b_blk, T, S, D, Dh, s_tile, cdt_bytes):
    f4 = 4
    # double-buffered q/k/v input blocks + output block
    io = 2 * b_blk * (T + 2 * S) * D * cdt_bytes + 2 * b_blk * T * D * f4
    # resident weights (Buffered(1) => single copy) + f32 biases
    weights = 4 * D * Dh * cdt_bytes + (3 * Dh + D) * f4
    # qh/kh/vh/outh projections in VMEM scratch
    scratch = b_blk * (2 * T + 2 * S) * Dh * cdt_bytes
    # per-head live set: logits/p tile + acc + m/l (all f32-ish)
    work = b_blk * T * (2 * s_tile + 2 * (Dh // 1) // max(1, 1) + 4) * f4
    est = io + weights + scratch + work
    try:
        cap = pltpu.get_tpu_info().vmem_capacity_bytes
    except Exception:
        cap = 64 * 1024 * 1024                 # assume v7x (smallest VMEM)
    return int(min(max(2 * est, 16 * 1024 * 1024), int(0.75 * cap)))


def multi_head_attention(q, k, v, params, num_heads,
                         compute_dtype=jnp.float32):
    """Pallas-backed equivalent of MultiHeadAttention.forward(q, k, v)[0]."""
    wq, bq, wk, bk, wv, bv, wo, bo = params
    B, T, D = q.shape
    _, S, _ = k.shape
    Dh = wq.shape[0]
    H = num_heads
    hd = Dh // H
    scale = hd ** (-0.5)
    cdt = compute_dtype

    # Host-side layout plumbing: pre-transpose, fold the Q scale, cast.
    wq_t = (wq.T * scale).astype(cdt)              # (D, Dh)
    wk_t = wk.T.astype(cdt)                        # (D, Dh)
    wv_t = wv.T.astype(cdt)                        # (D, Dh)
    wo_t = wo.T.astype(cdt)                        # (Dh, D)
    bq_s = (bq * scale).reshape(1, Dh).astype(jnp.float32)
    bk_r = bk.reshape(1, Dh).astype(jnp.float32)
    bv_r = bv.reshape(1, Dh).astype(jnp.float32)
    bo_r = bo.reshape(1, D).astype(jnp.float32)

    q_c = q.astype(cdt)
    k_c = k.astype(cdt)
    v_c = v.astype(cdt)

    b_blk = _pick_batch_block(B, T)
    s_tile = _pick_kv_tile(S)
    nb = B // b_blk
    cdt_bytes = jnp.dtype(cdt).itemsize

    seq_spec = lambda L: pl.BlockSpec((b_blk, L, D), lambda b: (b, 0, 0))

    def resident(shape):                           # weights stay in VMEM once
        return pl.BlockSpec(shape, lambda b: (0, 0),
                            pipeline_mode=pl.Buffered(1))

    kernel = functools.partial(mha_kernel, num_heads=H, head_dim=hd,
                               s_tile=s_tile)

    return pl.pallas_call(
        kernel,
        out_shape=jax.ShapeDtypeStruct((B, T, D), q.dtype),
        grid_spec=pltpu.PrefetchScalarGridSpec(
            num_scalar_prefetch=0,
            grid=(nb,),
            in_specs=[seq_spec(T), seq_spec(S), seq_spec(S),
                      resident((D, Dh)), resident((1, Dh)),
                      resident((D, Dh)), resident((1, Dh)),
                      resident((D, Dh)), resident((1, Dh)),
                      resident((Dh, D)), resident((1, D))],
            out_specs=pl.BlockSpec((b_blk, T, D), lambda b: (b, 0, 0)),
            scratch_shapes=[pltpu.VMEM((b_blk, T, Dh), cdt),
                            pltpu.VMEM((b_blk, S, Dh), cdt),
                            pltpu.VMEM((b_blk, S, Dh), cdt),
                            pltpu.VMEM((b_blk, T, Dh), cdt)],
        ),
        compiler_params=pltpu.CompilerParams(
            dimension_semantics=("parallel",),
            vmem_limit_bytes=_vmem_limit_bytes(b_blk, T, S, D, Dh, s_tile,
                                               cdt_bytes)),
    )(q_c, k_c, v_c, wq_t, bq_s, wk_t, bk_r, wv_t, bv_r, wo_t, bo_r)


def ref_mha(q, k, v, params, num_heads):
    """Plain-JAX f32 reference matching the PyTorch forward (default flags)."""
    wq, bq, wk, bk, wv, bv, wo, bo = params
    B, T, D = q.shape
    S = k.shape[1]
    Dh = wq.shape[0]
    hd = Dh // num_heads
    qp = (q @ wq.T + bq).reshape(B, T, num_heads, hd).transpose(0, 2, 1, 3)
    kp = (k @ wk.T + bk).reshape(B, S, num_heads, hd).transpose(0, 2, 1, 3)
    vp = (v @ wv.T + bv).reshape(B, S, num_heads, hd).transpose(0, 2, 1, 3)
    qp = qp * hd ** (-0.5)
    attn = jax.nn.softmax(jnp.einsum("bhtd,bhsd->bhts", qp, kp), axis=-1)
    out = jnp.einsum("bhts,bhsd->bhtd", attn, vp).transpose(0, 2, 1, 3)
    out = out.reshape(B, T, Dh)
    return out @ wo.T + bo


if __name__ == "__main__":
    # Small but lane-dense config: d_model multiple of 128, head_dim = 128.
    B, T, S = 2, 8, 8
    d_model = 256
    num_heads = 2
    d_model_hidden = d_model

    key = jax.random.PRNGKey(0)
    ks = jax.random.split(key, 11)
    q = jax.random.normal(ks[0], (B, T, d_model), jnp.float32)
    k = jax.random.normal(ks[1], (B, S, d_model), jnp.float32)
    v = jax.random.normal(ks[2], (B, S, d_model), jnp.float32)

    wscale = 0.1
    params = (
        jax.random.normal(ks[3], (d_model_hidden, d_model), jnp.float32) * wscale,  # Wq
        jax.random.normal(ks[4], (d_model_hidden,), jnp.float32) * wscale,           # bq
        jax.random.normal(ks[5], (d_model_hidden, d_model), jnp.float32) * wscale,  # Wk
        jax.random.normal(ks[6], (d_model_hidden,), jnp.float32) * wscale,           # bk
        jax.random.normal(ks[7], (d_model_hidden, d_model), jnp.float32) * wscale,  # Wv
        jax.random.normal(ks[8], (d_model_hidden,), jnp.float32) * wscale,           # bv
        jax.random.normal(ks[9], (d_model, d_model_hidden), jnp.float32) * wscale,  # Wo
        jax.random.normal(ks[10], (d_model,), jnp.float32) * wscale,                 # bo
    )

    ref = ref_mha(q, k, v, params, num_heads)
    ref_scale = max(1.0, float(jnp.max(jnp.abs(ref))))

    # f32 compute path (verification): tolerance covers possible reduced-
    # precision f32 MXU passes on hardware.
    out_f32 = jax.block_until_ready(
        multi_head_attention(q, k, v, params, num_heads,
                             compute_dtype=jnp.float32))
    assert out_f32.shape == (B, T, d_model)
    err_f32 = float(jnp.max(jnp.abs(out_f32 - ref)))
    tol_f32 = 3e-2 * ref_scale
    assert err_f32 <= tol_f32, f"f32 path max abs err {err_f32} > {tol_f32}"

    # bf16 MXU path (production setting): tolerance scaled to the output
    # magnitude, since bf16 operand rounding gives ~0.3-1% relative error.
    out_bf16 = jax.block_until_ready(
        multi_head_attention(q, k, v, params, num_heads,
                             compute_dtype=jnp.bfloat16))
    err_bf16 = float(jnp.max(jnp.abs(out_bf16 - ref)))
    tol_bf16 = 5e-2 * ref_scale
    assert err_bf16 <= tol_bf16, f"bf16 path max abs err {err_bf16} > {tol_bf16}"

    print("KERNEL_OK")
</pallas_src>

<mosaic_0001>
module attributes {stable_mosaic.version = 11 : i64} {
  func.func @mha_kernel(%arg0: i32, %arg1: memref<1x8x256xf32, #tpu.memory_space<vmem>>, %arg2: memref<1x8x256xf32, #tpu.memory_space<vmem>>, %arg3: memref<1x8x256xf32, #tpu.memory_space<vmem>>, %arg4: memref<256x256xf32, #tpu.memory_space<vmem>>, %arg5: memref<1x256xf32, #tpu.memory_space<vmem>>, %arg6: memref<256x256xf32, #tpu.memory_space<vmem>>, %arg7: memref<1x256xf32, #tpu.memory_space<vmem>>, %arg8: memref<256x256xf32, #tpu.memory_space<vmem>>, %arg9: memref<1x256xf32, #tpu.memory_space<vmem>>, %arg10: memref<256x256xf32, #tpu.memory_space<vmem>>, %arg11: memref<1x256xf32, #tpu.memory_space<vmem>>, %arg12: memref<1x8x256xf32, #tpu.memory_space<vmem>>, %arg13: memref<1x8x256xf32, #tpu.memory_space<vmem>>, %arg14: memref<1x8x256xf32, #tpu.memory_space<vmem>>, %arg15: memref<1x8x256xf32, #tpu.memory_space<vmem>>, %arg16: memref<1x8x256xf32, #tpu.memory_space<vmem>>) attributes {dimension_semantics = [#tpu.dimension_semantics<parallel>], iteration_bounds = array<i64: 2>, scalar_prefetch = 0 : i64, scratch_operands = 4 : i64, tpu.core_type = #tpu.core_type<tc>, window_params = [{transform_indices = @transform_0, window_bounds = array<i64: 1, 8, 256>}, {transform_indices = @transform_1, window_bounds = array<i64: 1, 8, 256>}, {transform_indices = @transform_2, window_bounds = array<i64: 1, 8, 256>}, {pipeline_mode = #tpu.pipeline_mode<synchronous>, transform_indices = @transform_3, window_bounds = array<i64: 256, 256>}, {pipeline_mode = #tpu.pipeline_mode<synchronous>, transform_indices = @transform_4, window_bounds = array<i64: 1, 256>}, {pipeline_mode = #tpu.pipeline_mode<synchronous>, transform_indices = @transform_5, window_bounds = array<i64: 256, 256>}, {pipeline_mode = #tpu.pipeline_mode<synchronous>, transform_indices = @transform_6, window_bounds = array<i64: 1, 256>}, {pipeline_mode = #tpu.pipeline_mode<synchronous>, transform_indices = @transform_7, window_bounds = array<i64: 256, 256>}, {pipeline_mode = #tpu.pipeline_mode<synchronous>, transform_indices = @transform_8, window_bounds = array<i64: 1, 256>}, {pipeline_mode = #tpu.pipeline_mode<synchronous>, transform_indices = @transform_9, window_bounds = array<i64: 256, 256>}, {pipeline_mode = #tpu.pipeline_mode<synchronous>, transform_indices = @transform_10, window_bounds = array<i64: 1, 256>}, {transform_indices = @transform_11, window_bounds = array<i64: 1, 8, 256>}]} {
    %c0 = arith.constant 0 : index
    %c0_0 = arith.constant 0 : index
    %c0_1 = arith.constant 0 : index
    %0 = vector.load %arg1[%c0, %c0_0, %c0_1] : memref<1x8x256xf32, #tpu.memory_space<vmem>>, vector<1x8x256xf32>
    %1 = vector.shape_cast %0 : vector<1x8x256xf32> to vector<8x256xf32>
    %c0_2 = arith.constant 0 : index
    %c0_3 = arith.constant 0 : index
    %c0_4 = arith.constant 0 : index
    %2 = vector.load %arg2[%c0_2, %c0_3, %c0_4] : memref<1x8x256xf32, #tpu.memory_space<vmem>>, vector<1x8x256xf32>
    %3 = vector.shape_cast %2 : vector<1x8x256xf32> to vector<8x256xf32>
    %c0_5 = arith.constant 0 : index
    %c0_6 = arith.constant 0 : index
    %c0_7 = arith.constant 0 : index
    %4 = vector.load %arg3[%c0_5, %c0_6, %c0_7] : memref<1x8x256xf32, #tpu.memory_space<vmem>>, vector<1x8x256xf32>
    %5 = vector.shape_cast %4 : vector<1x8x256xf32> to vector<8x256xf32>
    %c0_8 = arith.constant 0 : index
    %c0_9 = arith.constant 0 : index
    %6 = vector.load %arg4[%c0_8, %c0_9] : memref<256x256xf32, #tpu.memory_space<vmem>>, vector<256x256xf32>
    %cst = arith.constant dense<0.000000e+00> : vector<8x256xf32>
    %7 = tpu.matmul %1, %6, %cst {dimension_numbers = #tpu.dot_dimension_numbers<[1], [0], [0], [1], [0, 0, 1, 1], [], []>} : vector<8x256xf32>, vector<256x256xf32>, vector<8x256xf32> -> vector<8x256xf32>
    %c0_10 = arith.constant 0 : index
    %c0_11 = arith.constant 0 : index
    %8 = vector.load %arg5[%c0_10, %c0_11] : memref<1x256xf32, #tpu.memory_space<vmem>>, vector<1x256xf32>
    %9 = vector.broadcast %8 : vector<1x256xf32> to vector<8x256xf32>
    %10 = arith.addf %7, %9 : vector<8x256xf32>
    %11 = vector.shape_cast %10 : vector<8x256xf32> to vector<1x8x256xf32>
    %c0_12 = arith.constant 0 : index
    %c0_13 = arith.constant 0 : index
    %c0_14 = arith.constant 0 : index
    %12 = vector.load %arg13[%c0_12, %c0_13, %c0_14] : memref<1x8x256xf32, #tpu.memory_space<vmem>>, vector<1x8x256xf32>
    tpu.vector_store %arg13[%c0_12, %c0_13, %c0_14], %11 {strides = array<i32>} : memref<1x8x256xf32, #tpu.memory_space<vmem>>, vector<1x8x256xf32>,
    %c0_15 = arith.constant 0 : index
    %c0_16 = arith.constant 0 : index
    %13 = vector.load %arg6[%c0_15, %c0_16] : memref<256x256xf32, #tpu.memory_space<vmem>>, vector<256x256xf32>
    %cst_17 = arith.constant dense<0.000000e+00> : vector<8x256xf32>
    %14 = tpu.matmul %3, %13, %cst_17 {dimension_numbers = #tpu.dot_dimension_numbers<[1], [0], [0], [1], [0, 0, 1, 1], [], []>} : vector<8x256xf32>, vector<256x256xf32>, vector<8x256xf32> -> vector<8x256xf32>
    %c0_18 = arith.constant 0 : index
    %c0_19 = arith.constant 0 : index
    %15 = vector.load %arg7[%c0_18, %c0_19] : memref<1x256xf32, #tpu.memory_space<vmem>>, vector<1x256xf32>
    %16 = vector.broadcast %15 : vector<1x256xf32> to vector<8x256xf32>
    %17 = arith.addf %14, %16 : vector<8x256xf32>
    %18 = vector.shape_cast %17 : vector<8x256xf32> to vector<1x8x256xf32>
    %c0_20 = arith.constant 0 : index
    %c0_21 = arith.constant 0 : index
    %c0_22 = arith.constant 0 : index
    %19 = vector.load %arg14[%c0_20, %c0_21, %c0_22] : memref<1x8x256xf32, #tpu.memory_space<vmem>>, vector<1x8x256xf32>
    tpu.vector_store %arg14[%c0_20, %c0_21, %c0_22], %18 {strides = array<i32>} : memref<1x8x256xf32, #tpu.memory_space<vmem>>, vector<1x8x256xf32>,
    %c0_23 = arith.constant 0 : index
    %c0_24 = arith.constant 0 : index
    %20 = vector.load %arg8[%c0_23, %c0_24] : memref<256x256xf32, #tpu.memory_space<vmem>>, vector<256x256xf32>
    %cst_25 = arith.constant dense<0.000000e+00> : vector<8x256xf32>
    %21 = tpu.matmul %5, %20, %cst_25 {dimension_numbers = #tpu.dot_dimension_numbers<[1], [0], [0], [1], [0, 0, 1, 1], [], []>} : vector<8x256xf32>, vector<256x256xf32>, vector<8x256xf32> -> vector<8x256xf32>
    %c0_26 = arith.constant 0 : index
    %c0_27 = arith.constant 0 : index
    %22 = vector.load %arg9[%c0_26, %c0_27] : memref<1x256xf32, #tpu.memory_space<vmem>>, vector<1x256xf32>
    %23 = vector.broadcast %22 : vector<1x256xf32> to vector<8x256xf32>
    %24 = arith.addf %21, %23 : vector<8x256xf32>
    %25 = vector.shape_cast %24 : vector<8x256xf32> to vector<1x8x256xf32>
    %c0_28 = arith.constant 0 : index
    %c0_29 = arith.constant 0 : index
    %c0_30 = arith.constant 0 : index
    %26 = vector.load %arg15[%c0_28, %c0_29, %c0_30] : memref<1x8x256xf32, #tpu.memory_space<vmem>>, vector<1x8x256xf32>
    tpu.vector_store %arg15[%c0_28, %c0_29, %c0_30], %25 {strides = array<i32>} : memref<1x8x256xf32, #tpu.memory_space<vmem>>, vector<1x8x256xf32>,
    %c0_i32 = arith.constant 0 : i32
    %c2_i32 = arith.constant 2 : i32
    %27 = arith.addi %c0_i32, %c2_i32 : i32
    %c1_i32 = arith.constant 1 : i32
    scf.for %arg17 = %c0_i32 to %27 step %c1_i32  : i32 {
      %c128_i32 = arith.constant 128 : i32
      %37 = arith.muli %arg17, %c128_i32 : i32
      %38 = tpu.assume_multiple %37, 128 : i32
      %c0_43 = arith.constant 0 : index
      %c0_44 = arith.constant 0 : index
      %39 = arith.index_cast %38 : i32 to index
      %40 = vector.load %arg13[%c0_43, %c0_44, %39] : memref<1x8x256xf32, #tpu.memory_space<vmem>>, vector<1x8x128xf32>
      %cst_45 = arith.constant 0xFF800000 : f32
      %41 = vector.broadcast %cst_45 : f32 to vector<1x8x1xf32>
      %cst_46 = arith.constant 0.000000e+00 : f32
      %42 = vector.broadcast %cst_46 : f32 to vector<1x8x1xf32>
      %cst_47 = arith.constant 0.000000e+00 : f32
      %43 = vector.broadcast %cst_47 : f32 to vector<1x8x128xf32>
      %c0_i32_48 = arith.constant 0 : i32
      %c8_i32 = arith.constant 8 : i32
      %44 = arith.muli %c0_i32_48, %c8_i32 : i32
      %45 = tpu.assume_multiple %44, 8 : i32
      %c0_49 = arith.constant 0 : index
      %46 = arith.index_cast %45 : i32 to index
      %47 = arith.index_cast %38 : i32 to index
      %48 = vector.load %arg14[%c0_49, %46, %47] : memref<1x8x256xf32, #tpu.memory_space<vmem>>, vector<1x8x128xf32>
      %c0_50 = arith.constant 0 : index
      %49 = arith.index_cast %45 : i32 to index
      %50 = arith.index_cast %38 : i32 to index
      %51 = vector.load %arg15[%c0_50, %49, %50] : memref<1x8x256xf32, #tpu.memory_space<vmem>>, vector<1x8x128xf32>
      "tpu.trace_start"() <{level = 10 : i32, message = "btd,bsd->bts"}> : () -> ()
      %cst_51 = arith.constant dense<0.000000e+00> : vector<1x8x8xf32>
      %52 = tpu.matmul %40, %48, %cst_51 {dimension_numbers = #tpu.dot_dimension_numbers<[2], [2], [1], [1], [0, 0, 0, 1, 1, 1], [0], [0]>} : vector<1x8x128xf32>, vector<1x8x128xf32>, vector<1x8x8xf32> -> vector<1x8x8xf32>
      "tpu.trace_stop"() : () -> ()
      %cst_52 = arith.constant dense<0xFF800000> : vector<1x8xf32>
      %53 = vector.multi_reduction <maximumf>, %52, %cst_52 [2] : vector<1x8x8xf32> to vector<1x8xf32>
      %54 = vector.shape_cast %53 : vector<1x8xf32> to vector<1x8x1xf32>
      %55 = arith.maximumf %41, %54 : vector<1x8x1xf32>
      %56 = arith.subf %41, %55 : vector<1x8x1xf32>
      %57 = math.exp %56 : vector<1x8x1xf32>
      %58 = vector.broadcast %55 : vector<1x8x1xf32> to vector<1x8x8xf32>
      %59 = arith.subf %52, %58 : vector<1x8x8xf32>
      %60 = math.exp %59 : vector<1x8x8xf32>
      %61 = arith.mulf %57, %42 : vector<1x8x1xf32>
      %cst_53 = arith.constant dense<0.000000e+00> : vector<1x8xf32>
      %62 = vector.multi_reduction <add>, %60, %cst_53 [2] : vector<1x8x8xf32> to vector<1x8xf32>
      %63 = vector.shape_cast %62 : vector<1x8xf32> to vector<1x8x1xf32>
      %64 = arith.addf %61, %63 : vector<1x8x1xf32>
      "tpu.trace_start"() <{level = 10 : i32, message = "bts,bsd->btd"}> : () -> ()
      %cst_54 = arith.constant dense<0.000000e+00> : vector<1x8x128xf32>
      %65 = tpu.matmul %60, %51, %cst_54 {dimension_numbers = #tpu.dot_dimension_numbers<[2], [1], [1], [2], [0, 0, 0, 1, 1, 2], [0], [0]>} : vector<1x8x8xf32>, vector<1x8x128xf32>, vector<1x8x128xf32> -> vector<1x8x128xf32>
      "tpu.trace_stop"() : () -> ()
      %66 = vector.broadcast %57 : vector<1x8x1xf32> to vector<1x8x128xf32>
      %67 = arith.mulf %66, %43 : vector<1x8x128xf32>
      %68 = arith.addf %67, %65 : vector<1x8x128xf32>
      %c1_i32_55 = arith.constant 1 : i32
      %cst_56 = arith.constant 1.000000e+00 : f32
      %69 = vector.broadcast %cst_56 : f32 to vector<1x8x1xf32>
      %70 = arith.divf %69, %64 : vector<1x8x1xf32>
      %71 = vector.broadcast %70 : vector<1x8x1xf32> to vector<1x8x128xf32>
      %72 = arith.mulf %68, %71 : vector<1x8x128xf32>
      %c0_57 = arith.constant 0 : index
      %c0_58 = arith.constant 0 : index
      %73 = arith.index_cast %38 : i32 to index
      %74 = vector.load %arg16[%c0_57, %c0_58, %73] : memref<1x8x256xf32, #tpu.memory_space<vmem>>, vector<1x8x128xf32>
      tpu.vector_store %arg16[%c0_57, %c0_58, %73], %72 {strides = array<i32>} : memref<1x8x256xf32, #tpu.memory_space<vmem>>, vector<1x8x128xf32>,
    }
    %c2_i32_31 = arith.constant 2 : i32
    %c0_32 = arith.constant 0 : index
    %c0_33 = arith.constant 0 : index
    %c0_34 = arith.constant 0 : index
    %28 = vector.load %arg16[%c0_32, %c0_33, %c0_34] : memref<1x8x256xf32, #tpu.memory_space<vmem>>, vector<1x8x256xf32>
    %29 = vector.shape_cast %28 : vector<1x8x256xf32> to vector<8x256xf32>
    %c0_35 = arith.constant 0 : index
    %c0_36 = arith.constant 0 : index
    %30 = vector.load %arg10[%c0_35, %c0_36] : memref<256x256xf32, #tpu.memory_space<vmem>>, vector<256x256xf32>
    %cst_37 = arith.constant dense<0.000000e+00> : vector<8x256xf32>
    %31 = tpu.matmul %29, %30, %cst_37 {dimension_numbers = #tpu.dot_dimension_numbers<[1], [0], [0], [1], [0, 0, 1, 1], [], []>} : vector<8x256xf32>, vector<256x256xf32>, vector<8x256xf32> -> vector<8x256xf32>
    %c0_38 = arith.constant 0 : index
    %c0_39 = arith.constant 0 : index
    %32 = vector.load %arg11[%c0_38, %c0_39] : memref<1x256xf32, #tpu.memory_space<vmem>>, vector<1x256xf32>
    %33 = vector.broadcast %32 : vector<1x256xf32> to vector<8x256xf32>
    %34 = arith.addf %31, %33 : vector<8x256xf32>
    %35 = vector.shape_cast %34 : vector<8x256xf32> to vector<1x8x256xf32>
    %c0_40 = arith.constant 0 : index
    %c0_41 = arith.constant 0 : index
    %c0_42 = arith.constant 0 : index
    %36 = vector.load %arg12[%c0_40, %c0_41, %c0_42] : memref<1x8x256xf32, #tpu.memory_space<vmem>>, vector<1x8x256xf32>
    tpu.vector_store %arg12[%c0_40, %c0_41, %c0_42], %35 {strides = array<i32>} : memref<1x8x256xf32, #tpu.memory_space<vmem>>, vector<1x8x256xf32>,
    return
  }
  func.func @transform_0(%arg0: i32) -> (i32, i32, i32) {
    %c0_i32 = arith.constant 0 : i32
    %c0_i32_0 = arith.constant 0 : i32
    %c0_i32_1 = arith.constant 0 : i32
    return %arg0, %c0_i32, %c0_i32_0 : i32, i32, i32
  }
  func.func @transform_1(%arg0: i32) -> (i32, i32, i32) {
    %c0_i32 = arith.constant 0 : i32
    %c0_i32_0 = arith.constant 0 : i32
    %c0_i32_1 = arith.constant 0 : i32
    return %arg0, %c0_i32, %c0_i32_0 : i32, i32, i32
  }
  func.func @transform_2(%arg0: i32) -> (i32, i32, i32) {
    %c0_i32 = arith.constant 0 : i32
    %c0_i32_0 = arith.constant 0 : i32
    %c0_i32_1 = arith.constant 0 : i32
    return %arg0, %c0_i32, %c0_i32_0 : i32, i32, i32
  }
  func.func @transform_3(%arg0: i32) -> (i32, i32) {
    %c0_i32 = arith.constant 0 : i32
    %c0_i32_0 = arith.constant 0 : i32
    %c0_i32_1 = arith.constant 0 : i32
    return %c0_i32, %c0_i32_0 : i32, i32
  }
  func.func @transform_4(%arg0: i32) -> (i32, i32) {
    %c0_i32 = arith.constant 0 : i32
    %c0_i32_0 = arith.constant 0 : i32
    %c0_i32_1 = arith.constant 0 : i32
    return %c0_i32, %c0_i32_0 : i32, i32
  }
  func.func @transform_5(%arg0: i32) -> (i32, i32) {
    %c0_i32 = arith.constant 0 : i32
    %c0_i32_0 = arith.constant 0 : i32
    %c0_i32_1 = arith.constant 0 : i32
    return %c0_i32, %c0_i32_0 : i32, i32
  }
  func.func @transform_6(%arg0: i32) -> (i32, i32) {
    %c0_i32 = arith.constant 0 : i32
    %c0_i32_0 = arith.constant 0 : i32
    %c0_i32_1 = arith.constant 0 : i32
    return %c0_i32, %c0_i32_0 : i32, i32
  }
  func.func @transform_7(%arg0: i32) -> (i32, i32) {
    %c0_i32 = arith.constant 0 : i32
    %c0_i32_0 = arith.constant 0 : i32
    %c0_i32_1 = arith.constant 0 : i32
    return %c0_i32, %c0_i32_0 : i32, i32
  }
  func.func @transform_8(%arg0: i32) -> (i32, i32) {
    %c0_i32 = arith.constant 0 : i32
    %c0_i32_0 = arith.constant 0 : i32
    %c0_i32_1 = arith.constant 0 : i32
    return %c0_i32, %c0_i32_0 : i32, i32
  }
  func.func @transform_9(%arg0: i32) -> (i32, i32) {
    %c0_i32 = arith.constant 0 : i32
    %c0_i32_0 = arith.constant 0 : i32
    %c0_i32_1 = arith.constant 0 : i32
    return %c0_i32, %c0_i32_0 : i32, i32
  }
  func.func @transform_10(%arg0: i32) -> (i32, i32) {
    %c0_i32 = arith.constant 0 : i32
    %c0_i32_0 = arith.constant 0 : i32
    %c0_i32_1 = arith.constant 0 : i32
    return %c0_i32, %c0_i32_0 : i32, i32
  }
  func.func @transform_11(%arg0: i32) -> (i32, i32, i32) {
    %c0_i32 = arith.constant 0 : i32
    %c0_i32_0 = arith.constant 0 : i32
    %c0_i32_1 = arith.constant 0 : i32
    return %arg0, %c0_i32, %c0_i32_0 : i32, i32, i32
  }
}

</mosaic_0001>

<llo_original>
// kernel: tpu_custom_call.1
$region0: #{tpu_custom_call.1}
  #allocation0 [shape = 'u32[]', space=smem, size = 0x4, offset = 0x4, fixed_abs, tag = 'smem constant byte address 0x4 - core index']
  #allocation1 [shape = 'u32[144,128]{1,0:T(1,128)}', space=vmem, size = 0x12000, scoped, tag = 'internal scratch']
  #allocation2 [shape = 'f32[1,8,256]{2,1,0:T(8,128)}', space=vmem, size = 0x2000, scoped, tag = 'scratch operand']
  #allocation3 [shape = 'f32[1,8,256]{2,1,0:T(8,128)}', space=vmem, size = 0x2000, scoped, tag = 'scratch operand']
  #allocation4 [shape = 'f32[1,8,256]{2,1,0:T(8,128)}', space=vmem, size = 0x2000, scoped, tag = 'scratch operand']
  #allocation5 [shape = 'f32[1,8,256]{2,1,0:T(8,128)}', space=vmem, size = 0x2000, scoped, tag = 'scratch operand']
  %s0 = inlined_call_operand.hbm [shape: f32[2,8,256], index: 0, kind: input, shape index: {}]
  %s1 = inlined_call_operand.hbm [shape: f32[2,8,256], index: 1, kind: input, shape index: {}]
  %s2 = inlined_call_operand.hbm [shape: f32[2,8,256], index: 2, kind: input, shape index: {}]
  %s3 = inlined_call_operand.hbm [shape: f32[256,256], index: 3, kind: input, shape index: {}]
  %s4 = inlined_call_operand.vmem [shape: f32[1,256], index: 4, kind: input, shape index: {}]
  %s5 = inlined_call_operand.hbm [shape: f32[256,256], index: 5, kind: input, shape index: {}]
  %s6 = inlined_call_operand.vmem [shape: f32[1,256], index: 6, kind: input, shape index: {}]
  %s7 = inlined_call_operand.hbm [shape: f32[256,256], index: 7, kind: input, shape index: {}]
  %s8 = inlined_call_operand.vmem [shape: f32[1,256], index: 8, kind: input, shape index: {}]
  %s9 = inlined_call_operand.hbm [shape: f32[256,256], index: 9, kind: input, shape index: {}]
  %s10 = inlined_call_operand.vmem [shape: f32[1,256], index: 10, kind: input, shape index: {}]
  %s11 = inlined_call_operand.hbm [shape: f32[2,8,256], index: 11, kind: output, shape index: {}]
  %s12 = sld [smem:[#allocation0]]
  $region112: #{tpu_custom_call.1} parent=0
    _
  %s14 = ssub.s32 1, %s12
  %s15 = scalar_select 0, %s14, %s12
  $region1: #{tpu_custom_call.1} parent=0
    #allocation6 [shape = 'u8[16384]{0}', space=vmem, size = 0x4000, scoped, tag = 'input window, operand 0']
    #allocation7 [shape = 's32[2]{0}', space=sflag, size = 0x8, scoped, tag = 'scoped memory for tpu_custom_call.1']
    #allocation8 [shape = 's32[2]{0}', space=sflag, size = 0x8, scoped, tag = 'scoped memory for tpu_custom_call.1']
    #allocation9 [shape = 'u8[16384]{0}', space=vmem, size = 0x4000, scoped, tag = 'input window, operand 1']
    #allocation10 [shape = 's32[2]{0}', space=sflag, size = 0x8, scoped, tag = 'scoped memory for tpu_custom_call.1']
    #allocation11 [shape = 'u8[16384]{0}', space=vmem, size = 0x4000, scoped, tag = 'input window, operand 2']
    #allocation12 [shape = 'u8[262144]{0}', space=vmem, size = 0x40000, scoped, tag = 'input window, operand 3, single buffered']
    #allocation13 [shape = 's32[1]{0}', space=sflag, size = 0x4, scoped, tag = 'scoped memory for tpu_custom_call.1']
    #allocation14 [shape = 'u8[262144]{0}', space=vmem, size = 0x40000, scoped, tag = 'input window, operand 5, single buffered']
    #allocation15 [shape = 'u8[262144]{0}', space=vmem, size = 0x40000, scoped, tag = 'input window, operand 7, single buffered']
    #allocation16 [shape = 's32[1]{0}', space=sflag, size = 0x4, scoped, tag = 'scoped memory for tpu_custom_call.1']
    #allocation17 [shape = 'u8[262144]{0}', space=vmem, size = 0x40000, scoped, tag = 'input window, operand 9, single buffered']
    #allocation18 [shape = 'u8[16384]{0}', space=vmem, size = 0x4000, scoped, tag = 'output window, operand 0']
    %16 = vsyncpa [#allocation7], 0
    %s17 = scalar_lea.sflag [#allocation7], 1
    %18 = vsyncpa %s17, 0
    %19 = vsyncpa [#allocation10], 0
    %s20 = scalar_lea.sflag [#allocation10], 1
    %21 = vsyncpa %s20, 0
    %22 = vsyncpa [#allocation13], 0
    %23 = vsyncpa [#allocation16], 0
    %24 = vsyncpa [#allocation8], 0
    %s25 = scalar_lea.sflag [#allocation8], 1
    %26 = vsyncpa %s25, 0
    loop: start=0, step=1, limit=4
    $region2: #{tpu_custom_call.1} parent=1 // loop_pre_header
      _
    $region3: #{tpu_custom_call.1} parent=1 // loop_header
      %s28 = sphi 0, %s32
      %p29 = scmp.ge.s32.totalorder %s28, 4
      %s38 = sphi 0, %s40
      %s41 = sphi 0, %s38
      %s42 = sphi 0, %s41
      %s58 = sphi 0, %s42
      %s64 = sphi 0, %s66
      %s67 = sphi 0, %s64
      %s68 = sphi 0, %s67
      %s84 = sphi 0, %s68
      %s90 = sphi 0, %s92
      %s93 = sphi 0, %s90
      %s94 = sphi 0, %s93
      %s110 = sphi 0, %s94
      %s114 = sphi 0, %s114
      %s116 = sphi 0, %s114
      %s117 = sphi 0, %s116
      %s131 = sphi 0, %s117
      %s135 = sphi 0, %s135
      %s137 = sphi 0, %s135
      %s138 = sphi 0, %s137
      %s152 = sphi 0, %s138
      %s156 = sphi 0, %s156
      %s158 = sphi 0, %s156
      %s159 = sphi 0, %s158
      %s173 = sphi 0, %s159
      %s177 = sphi 0, %s177
      %s179 = sphi 0, %s177
      %s180 = sphi 0, %s179
      %s194 = sphi 0, %s180
      %s198 = sphi 0, %s198
      %s200 = sphi 0, %s198
      %s201 = sphi 0, %s200
      %s215 = sphi 0, %s201
      %s219 = sphi 0, %s219
      %s221 = sphi 0, %s219
      %s222 = sphi 0, %s221
      %s236 = sphi 0, %s222
      %s240 = sphi 0, %s240
      %s242 = sphi 0, %s240
      %s243 = sphi 0, %s242
      %s257 = sphi 0, %s243
      %s261 = sphi 0, %s261
      %s263 = sphi 0, %s261
      %s264 = sphi 0, %s263
      %s278 = sphi 0, %s264
      %s284 = sphi 0, %s286
      %s287 = sphi 0, %s284
      %s288 = sphi 0, %s287
      %s304 = sphi 0, %s288
    $region4: #{tpu_custom_call.1} parent=1 // loop_header_branch
      %31 = sbr.rel (%p29) target = $region8
    $region5: #{tpu_custom_call.1} parent=1 // loop_body
      %s33 = ssub.s32 %s28, 1
      %s34 = ssub.s32 %s28, 2
      %s35 = sadd.s32 %s28, 1
      %s36 = ssub.s32 %s28, %s35
      %p37 = scmp.eq.s32.totalorder %s36, 0
      %s39 = sadd.s32 %s38, 1
      %s40 = scalar_select %p37, %s38, %s39
      %p43 = pneg %p37
      %p44 = scmp.eq.s32.totalorder %s28, 1
      %p45 = por %p43, %p44
      %p46 = scmp.ne.s32.totalorder %s38, %s41
      %p47 = scmp.eq.s32.totalorder %s28, 0
      %p48 = por %p46, %p47
      %p49 = scmp.ne.s32.totalorder %s38, %s41
      %p50 = scmp.eq.s32.totalorder %s33, 1
      %p51 = por %p49, %p50
      %p52 = scmp.ne.s32.totalorder %s41, %s42
      %p53 = scmp.eq.s32.totalorder %s33, 0
      %p54 = por %p52, %p53
      %p55 = scmp.ne.s32.totalorder %s41, %s42
      %p56 = scmp.eq.s32.totalorder %s34, 1
      %p57 = por %p55, %p56
      %p59 = scmp.ne.s32.totalorder %s42, %s58
      %p60 = scmp.eq.s32.totalorder %s34, 0
      %p61 = por %p59, %p60
      %s62 = ssub.s32 %s28, %s35
      %p63 = scmp.eq.s32.totalorder %s62, 0
      %s65 = sadd.s32 %s64, 1
      %s66 = scalar_select %p63, %s64, %s65
      %p69 = pneg %p63
      %p70 = scmp.eq.s32.totalorder %s28, 1
      %p71 = por %p69, %p70
      %p72 = scmp.ne.s32.totalorder %s64, %s67
      %p73 = scmp.eq.s32.totalorder %s28, 0
      %p74 = por %p72, %p73
      %p75 = scmp.ne.s32.totalorder %s64, %s67
      %p76 = scmp.eq.s32.totalorder %s33, 1
      %p77 = por %p75, %p76
      %p78 = scmp.ne.s32.totalorder %s67, %s68
      %p79 = scmp.eq.s32.totalorder %s33, 0
      %p80 = por %p78, %p79
      %p81 = scmp.ne.s32.totalorder %s67, %s68
      %p82 = scmp.eq.s32.totalorder %s34, 1
      %p83 = por %p81, %p82
      %p85 = scmp.ne.s32.totalorder %s68, %s84
      %p86 = scmp.eq.s32.totalorder %s34, 0
      %p87 = por %p85, %p86
      %s88 = ssub.s32 %s28, %s35
      %p89 = scmp.eq.s32.totalorder %s88, 0
      %s91 = sadd.s32 %s90, 1
      %s92 = scalar_select %p89, %s90, %s91
      %p95 = pneg %p89
      %p96 = scmp.eq.s32.totalorder %s28, 1
      %p97 = por %p95, %p96
      %p98 = scmp.ne.s32.totalorder %s90, %s93
      %p99 = scmp.eq.s32.totalorder %s28, 0
      %p100 = por %p98, %p99
      %p101 = scmp.ne.s32.totalorder %s90, %s93
      %p102 = scmp.eq.s32.totalorder %s33, 1
      %p103 = por %p101, %p102
      %p104 = scmp.ne.s32.totalorder %s93, %s94
      %p105 = scmp.eq.s32.totalorder %s33, 0
      %p106 = por %p104, %p105
      %p107 = scmp.ne.s32.totalorder %s93, %s94
      %p108 = scmp.eq.s32.totalorder %s34, 1
      %p109 = por %p107, %p108
      %p111 = scmp.ne.s32.totalorder %s94, %s110
      %p112 = scmp.eq.s32.totalorder %s34, 0
      %p113 = por %p111, %p112
      %s115 = sadd.s32 %s114, 1
      %p118 = scmp.eq.s32.totalorder %s28, 1
      %p119 = scmp.ne.s32.totalorder %s114, %s116
      %p120 = scmp.eq.s32.totalorder %s28, 0
      %p121 = por %p119, %p120
      %p122 = scmp.ne.s32.totalorder %s114, %s116
      %p123 = scmp.eq.s32.totalorder %s33, 1
      %p124 = por %p122, %p123
      %p125 = scmp.ne.s32.totalorder %s116, %s117
      %p126 = scmp.eq.s32.totalorder %s33, 0
      %p127 = por %p125, %p126
      %p128 = scmp.ne.s32.totalorder %s116, %s117
      %p129 = scmp.eq.s32.totalorder %s34, 1
      %p130 = por %p128, %p129
      %p132 = scmp.ne.s32.totalorder %s117, %s131
      %p133 = scmp.eq.s32.totalorder %s34, 0
      %p134 = por %p132, %p133
      %s136 = sadd.s32 %s135, 1
      %p139 = scmp.eq.s32.totalorder %s28, 1
      %p140 = scmp.ne.s32.totalorder %s135, %s137
      %p141 = scmp.eq.s32.totalorder %s28, 0
      %p142 = por %p140, %p141
      %p143 = scmp.ne.s32.totalorder %s135, %s137
      %p144 = scmp.eq.s32.totalorder %s33, 1
      %p145 = por %p143, %p144
      %p146 = scmp.ne.s32.totalorder %s137, %s138
      %p147 = scmp.eq.s32.totalorder %s33, 0
      %p148 = por %p146, %p147
      %p149 = scmp.ne.s32.totalorder %s137, %s138
      %p150 = scmp.eq.s32.totalorder %s34, 1
      %p151 = por %p149, %p150
      %p153 = scmp.ne.s32.totalorder %s138, %s152
      %p154 = scmp.eq.s32.totalorder %s34, 0
      %p155 = por %p153, %p154
      %s157 = sadd.s32 %s156, 1
      %p160 = scmp.eq.s32.totalorder %s28, 1
      %p161 = scmp.ne.s32.totalorder %s156, %s158
      %p162 = scmp.eq.s32.totalorder %s28, 0
      %p163 = por %p161, %p162
      %p164 = scmp.ne.s32.totalorder %s156, %s158
      %p165 = scmp.eq.s32.totalorder %s33, 1
      %p166 = por %p164, %p165
      %p167 = scmp.ne.s32.totalorder %s158, %s159
      %p168 = scmp.eq.s32.totalorder %s33, 0
      %p169 = por %p167, %p168
      %p170 = scmp.ne.s32.totalorder %s158, %s159
      %p171 = scmp.eq.s32.totalorder %s34, 1
      %p172 = por %p170, %p171
      %p174 = scmp.ne.s32.totalorder %s159, %s173
      %p175 = scmp.eq.s32.totalorder %s34, 0
      %p176 = por %p174, %p175
      %s178 = sadd.s32 %s177, 1
      %p181 = scmp.eq.s32.totalorder %s28, 1
      %p182 = scmp.ne.s32.totalorder %s177, %s179
      %p183 = scmp.eq.s32.totalorder %s28, 0
      %p184 = por %p182, %p183
      %p185 = scmp.ne.s32.totalorder %s177, %s179
      %p186 = scmp.eq.s32.totalorder %s33, 1
      %p187 = por %p185, %p186
      %p188 = scmp.ne.s32.totalorder %s179, %s180
      %p189 = scmp.eq.s32.totalorder %s33, 0
      %p190 = por %p188, %p189
      %p191 = scmp.ne.s32.totalorder %s179, %s180
      %p192 = scmp.eq.s32.totalorder %s34, 1
      %p193 = por %p191, %p192
      %p195 = scmp.ne.s32.totalorder %s180, %s194
      %p196 = scmp.eq.s32.totalorder %s34, 0
      %p197 = por %p195, %p196
      %s199 = sadd.s32 %s198, 1
      %p202 = scmp.eq.s32.totalorder %s28, 1
      %p203 = scmp.ne.s32.totalorder %s198, %s200
      %p204 = scmp.eq.s32.totalorder %s28, 0
      %p205 = por %p203, %p204
      %p206 = scmp.ne.s32.totalorder %s198, %s200
      %p207 = scmp.eq.s32.totalorder %s33, 1
      %p208 = por %p206, %p207
      %p209 = scmp.ne.s32.totalorder %s200, %s201
      %p210 = scmp.eq.s32.totalorder %s33, 0
      %p211 = por %p209, %p210
      %p212 = scmp.ne.s32.totalorder %s200, %s201
      %p213 = scmp.eq.s32.totalorder %s34, 1
      %p214 = por %p212, %p213
      %p216 = scmp.ne.s32.totalorder %s201, %s215
      %p217 = scmp.eq.s32.totalorder %s34, 0
      %p218 = por %p216, %p217
      %s220 = sadd.s32 %s219, 1
      %p223 = scmp.eq.s32.totalorder %s28, 1
      %p224 = scmp.ne.s32.totalorder %s219, %s221
      %p225 = scmp.eq.s32.totalorder %s28, 0
      %p226 = por %p224, %p225
      %p227 = scmp.ne.s32.totalorder %s219, %s221
      %p228 = scmp.eq.s32.totalorder %s33, 1
      %p229 = por %p227, %p228
      %p230 = scmp.ne.s32.totalorder %s221, %s222
      %p231 = scmp.eq.s32.totalorder %s33, 0
      %p232 = por %p230, %p231
      %p233 = scmp.ne.s32.totalorder %s221, %s222
      %p234 = scmp.eq.s32.totalorder %s34, 1
      %p235 = por %p233, %p234
      %p237 = scmp.ne.s32.totalorder %s222, %s236
      %p238 = scmp.eq.s32.totalorder %s34, 0
      %p239 = por %p237, %p238
      %s241 = sadd.s32 %s240, 1
      %p244 = scmp.eq.s32.totalorder %s28, 1
      %p245 = scmp.ne.s32.totalorder %s240, %s242
      %p246 = scmp.eq.s32.totalorder %s28, 0
      %p247 = por %p245, %p246
      %p248 = scmp.ne.s32.totalorder %s240, %s242
      %p249 = scmp.eq.s32.totalorder %s33, 1
      %p250 = por %p248, %p249
      %p251 = scmp.ne.s32.totalorder %s242, %s243
      %p252 = scmp.eq.s32.totalorder %s33, 0
      %p253 = por %p251, %p252
      %p254 = scmp.ne.s32.totalorder %s242, %s243
      %p255 = scmp.eq.s32.totalorder %s34, 1
      %p256 = por %p254, %p255
      %p258 = scmp.ne.s32.totalorder %s243, %s257
      %p259 = scmp.eq.s32.totalorder %s34, 0
      %p260 = por %p258, %p259
      %s262 = sadd.s32 %s261, 1
      %p265 = scmp.eq.s32.totalorder %s28, 1
      %p266 = scmp.ne.s32.totalorder %s261, %s263
      %p267 = scmp.eq.s32.totalorder %s28, 0
      %p268 = por %p266, %p267
      %p269 = scmp.ne.s32.totalorder %s261, %s263
      %p270 = scmp.eq.s32.totalorder %s33, 1
      %p271 = por %p269, %p270
      %p272 = scmp.ne.s32.totalorder %s263, %s264
      %p273 = scmp.eq.s32.totalorder %s33, 0
      %p274 = por %p272, %p273
      %p275 = scmp.ne.s32.totalorder %s263, %s264
      %p276 = scmp.eq.s32.totalorder %s34, 1
      %p277 = por %p275, %p276
      %p279 = scmp.ne.s32.totalorder %s264, %s278
      %p280 = scmp.eq.s32.totalorder %s34, 0
      %p281 = por %p279, %p280
      %s282 = ssub.s32 %s28, %s35
      %p283 = scmp.eq.s32.totalorder %s282, 0
      %s285 = sadd.s32 %s284, 1
      %s286 = scalar_select %p283, %s284, %s285
      %p289 = pneg %p283
      %p290 = scmp.eq.s32.totalorder %s28, 1
      %p291 = por %p289, %p290
      %p292 = scmp.ne.s32.totalorder %s284, %s287
      %p293 = scmp.eq.s32.totalorder %s28, 0
      %p294 = por %p292, %p293
      %p295 = scmp.ne.s32.totalorder %s284, %s287
      %p296 = scmp.eq.s32.totalorder %s33, 1
      %p297 = por %p295, %p296
      %p298 = scmp.ne.s32.totalorder %s287, %s288
      %p299 = scmp.eq.s32.totalorder %s33, 0
      %p300 = por %p298, %p299
      %p301 = scmp.ne.s32.totalorder %s287, %s288
      %p302 = scmp.eq.s32.totalorder %s34, 1
      %p303 = por %p301, %p302
      %p305 = scmp.ne.s32.totalorder %s288, %s304
      %p306 = scmp.eq.s32.totalorder %s34, 0
      %p307 = por %p305, %p306
      %p308 = scmp.le.s32.totalorder 1, %s28
      %p309 = scmp.lt.s32.totalorder %s28, 3
      %p310 = pnand %p308, %p309
      %p311 = pneg %p310
      // Predicated region
      $region9: #{tpu_custom_call.1} parent=5 // pred_check
        _
      $region10: #{tpu_custom_call.1} parent=5 // pred_check_branch
        %313 = sbr.rel (%p310) target = $region12
      $region11: #{tpu_custom_call.1} parent=5 // pred_region
        %s314 = ssub.s32 %s28, 1
        // Predicated region
        $region13: #{tpu_custom_call.1} parent=11 // pred_check
          %p315 = pneg %p127
        $region14: #{tpu_custom_call.1} parent=11 // pred_check_branch
          %317 = sbr.rel (%p315) target = $region16
        $region15: #{tpu_custom_call.1} parent=11 // pred_region
          %s319 = ssub.s32 8192, 8192
          %320 = vsyncadd [#allocation13], %s319
          %s321 = sshll.u32 [#allocation12], 4
          %s322 = int_to_ptr.vmem [resolvable:$true] %s321
          %327 = dma.hbm_to_vmem [thread:$0]  %s3, 8192, %s322, [#allocation13], 256, 256, 16
        $region16: #{tpu_custom_call.1} parent=11 // pred_fallthru
          _
        // Predicated region
        $region17: #{tpu_custom_call.1} parent=11 // pred_check
          %p328 = pneg %p148
        $region18: #{tpu_custom_call.1} parent=11 // pred_check_branch
          %330 = sbr.rel (%p328) target = $region20
        $region19: #{tpu_custom_call.1} parent=11 // pred_region
          _
        $region20: #{tpu_custom_call.1} parent=11 // pred_fallthru
          _
        // Predicated region
        $region21: #{tpu_custom_call.1} parent=11 // pred_check
          %p331 = pneg %p169
        $region22: #{tpu_custom_call.1} parent=11 // pred_check_branch
          %333 = sbr.rel (%p331) target = $region24
        $region23: #{tpu_custom_call.1} parent=11 // pred_region
          %s335 = ssub.s32 8192, 8192
          %336 = vsyncadd [#allocation13], %s335
          %s337 = sshll.u32 [#allocation14], 4
          %s338 = int_to_ptr.vmem [resolvable:$true] %s337
          %343 = dma.hbm_to_vmem [thread:$0]  %s5, 8192, %s338, [#allocation13], 256, 256, 16
        $region24: #{tpu_custom_call.1} parent=11 // pred_fallthru
          _
        // Predicated region
        $region25: #{tpu_custom_call.1} parent=11 // pred_check
          %p344 = pneg %p190
        $region26: #{tpu_custom_call.1} parent=11 // pred_check_branch
          %346 = sbr.rel (%p344) target = $region28
        $region27: #{tpu_custom_call.1} parent=11 // pred_region
          _
        $region28: #{tpu_custom_call.1} parent=11 // pred_fallthru
          _
        // Predicated region
        $region29: #{tpu_custom_call.1} parent=11 // pred_check
          %p347 = pneg %p211
        $region30: #{tpu_custom_call.1} parent=11 // pred_check_branch
          %349 = sbr.rel (%p347) target = $region32
        $region31: #{tpu_custom_call.1} parent=11 // pred_region
          %s351 = ssub.s32 8192, 8192
          %352 = vsyncadd [#allocation16], %s351
          %s353 = sshll.u32 [#allocation15], 4
          %s354 = int_to_ptr.vmem [resolvable:$true] %s353
          %359 = dma.hbm_to_vmem [thread:$0]  %s7, 8192, %s354, [#allocation16], 256, 256, 16
        $region32: #{tpu_custom_call.1} parent=11 // pred_fallthru
          _
        // Predicated region
        $region33: #{tpu_custom_call.1} parent=11 // pred_check
          %p360 = pneg %p232
        $region34: #{tpu_custom_call.1} parent=11 // pred_check_branch
          %362 = sbr.rel (%p360) target = $region36
        $region35: #{tpu_custom_call.1} parent=11 // pred_region
          _
        $region36: #{tpu_custom_call.1} parent=11 // pred_fallthru
          _
        // Predicated region
        $region37: #{tpu_custom_call.1} parent=11 // pred_check
          %p363 = pneg %p253
        $region38: #{tpu_custom_call.1} parent=11 // pred_check_branch
          %365 = sbr.rel (%p363) target = $region40
        $region39: #{tpu_custom_call.1} parent=11 // pred_region
          %s367 = ssub.s32 8192, 8192
          %368 = vsyncadd [#allocation16], %s367
          %s369 = sshll.u32 [#allocation17], 4
          %s370 = int_to_ptr.vmem [resolvable:$true] %s369
          %375 = dma.hbm_to_vmem [thread:$0]  %s9, 8192, %s370, [#allocation16], 256, 256, 16
        $region40: #{tpu_custom_call.1} parent=11 // pred_fallthru
          _
        // Predicated region
        $region41: #{tpu_custom_call.1} parent=11 // pred_check
          %p376 = pneg %p274
        $region42: #{tpu_custom_call.1} parent=11 // pred_check_branch
          %378 = sbr.rel (%p376) target = $region44
        $region43: #{tpu_custom_call.1} parent=11 // pred_region
          _
        $region44: #{tpu_custom_call.1} parent=11 // pred_fallthru
          _
      $region12: #{tpu_custom_call.1} parent=5 // pred_fallthru
        _
      %p379 = scmp.lt.s32.totalorder %s28, 2
      // Predicated region
      $region45: #{tpu_custom_call.1} parent=5 // pred_check
        %p380 = pneg %p379
      $region46: #{tpu_custom_call.1} parent=5 // pred_check_branch
        %382 = sbr.rel (%p380) target = $region48
      $region47: #{tpu_custom_call.1} parent=5 // pred_region
        // Predicated region
        $region49: #{tpu_custom_call.1} parent=47 // pred_check
          %p383 = pneg %p48
        $region50: #{tpu_custom_call.1} parent=47 // pred_check_branch
          %385 = sbr.rel (%p383) target = $region52
        $region51: #{tpu_custom_call.1} parent=47 // pred_region
          %s386 = sand.u32 %s38, 1
          %s387 = scalar_lea.sflag [#allocation7], %s386
          %s388 = sand.u32 %s38, 1
          %s389 = smul.addr %s388, 16
          %s390 = scalar_lea.vmem [#allocation6], %s389
          %s392 = ssub.s32 256, 256
          %393 = vsyncadd %s387, %s392
          %s394 = smul.addr %s28, 2
          %s395 = smul.addr %s394, 128
          %s396 = scalar_lea.hbm %s0, %s395
          %s398 = sshll.u32 %s390, 4
          %s399 = int_to_ptr.vmem [resolvable:$true] %s398
          %401 = dma.hbm_to_vmem [thread:$0]  %s396, 256, %s399, %s387
        $region52: #{tpu_custom_call.1} parent=47 // pred_fallthru
          _
        // Predicated region
        $region53: #{tpu_custom_call.1} parent=47 // pred_check
          %p402 = pneg %p74
        $region54: #{tpu_custom_call.1} parent=47 // pred_check_branch
          %404 = sbr.rel (%p402) target = $region56
        $region55: #{tpu_custom_call.1} parent=47 // pred_region
          %s405 = sand.u32 %s28, 1
          %s406 = scalar_lea.sflag [#allocation10], %s405
          %s407 = sand.u32 %s64, 1
          %s408 = smul.addr %s407, 16
          %s409 = scalar_lea.vmem [#allocation9], %s408
          %s411 = ssub.s32 256, 256
          %412 = vsyncadd %s406, %s411
          %s413 = smul.addr %s28, 2
          %s414 = smul.addr %s413, 128
          %s415 = scalar_lea.hbm %s1, %s414
          %s417 = sshll.u32 %s409, 4
          %s418 = int_to_ptr.vmem [resolvable:$true] %s417
          %420 = dma.hbm_to_vmem [thread:$0]  %s415, 256, %s418, %s406
        $region56: #{tpu_custom_call.1} parent=47 // pred_fallthru
          _
        // Predicated region
        $region57: #{tpu_custom_call.1} parent=47 // pred_check
          %p421 = pneg %p100
        $region58: #{tpu_custom_call.1} parent=47 // pred_check_branch
          %423 = sbr.rel (%p421) target = $region60
        $region59: #{tpu_custom_call.1} parent=47 // pred_region
          %s424 = sand.u32 %s28, 1
          %s425 = scalar_lea.sflag [#allocation10], %s424
          %s426 = sand.u32 %s90, 1
          %s427 = smul.addr %s426, 16
          %s428 = scalar_lea.vmem [#allocation11], %s427
          %s430 = ssub.s32 256, 256
          %431 = vsyncadd %s425, %s430
          %s432 = smul.addr %s28, 2
          %s433 = smul.addr %s432, 128
          %s434 = scalar_lea.hbm %s2, %s433
          %s436 = sshll.u32 %s428, 4
          %s437 = int_to_ptr.vmem [resolvable:$true] %s436
          %439 = dma.hbm_to_vmem [thread:$0]  %s434, 256, %s437, %s425
        $region60: #{tpu_custom_call.1} parent=47 // pred_fallthru
          _
      $region48: #{tpu_custom_call.1} parent=5 // pred_fallthru
        _
      %p440 = scmp.le.s32.totalorder 1, %s28
      %p441 = scmp.lt.s32.totalorder %s28, 3
      %p442 = pnand %p440, %p441
      %p443 = pneg %p442
      // Predicated region
      $region61: #{tpu_custom_call.1} parent=5 // pred_check
        _
      $region62: #{tpu_custom_call.1} parent=5 // pred_check_branch
        %445 = sbr.rel (%p442) target = $region64
      $region63: #{tpu_custom_call.1} parent=5 // pred_region
        %s446 = ssub.s32 %s28, 1
        %s447 = sand.u32 %s41, 1
        %s448 = scalar_lea.sflag [#allocation7], %s447
        %s449 = sand.u32 %s41, 1
        %s450 = smul.addr %s449, 16
        %s451 = scalar_lea.vmem [#allocation6], %s450
        // Predicated region
        $region65: #{tpu_custom_call.1} parent=63 // pred_check
          %p452 = pneg %p54
        $region66: #{tpu_custom_call.1} parent=63 // pred_check_branch
          %454 = sbr.rel (%p452) target = $region68
        $region67: #{tpu_custom_call.1} parent=63 // pred_region
          %455 = dma.done %s448, 256
        $region68: #{tpu_custom_call.1} parent=63 // pred_fallthru
          _
        %s456 = sand.u32 %s33, 1
        %s457 = scalar_lea.sflag [#allocation10], %s456
        %s458 = sand.u32 %s67, 1
        %s459 = smul.addr %s458, 16
        %s460 = scalar_lea.vmem [#allocation9], %s459
        // Predicated region
        $region69: #{tpu_custom_call.1} parent=63 // pred_check
          %p461 = pneg %p80
        $region70: #{tpu_custom_call.1} parent=63 // pred_check_branch
          %463 = sbr.rel (%p461) target = $region72
        $region71: #{tpu_custom_call.1} parent=63 // pred_region
          %464 = dma.done %s457, 256
        $region72: #{tpu_custom_call.1} parent=63 // pred_fallthru
          _
        %s465 = sand.u32 %s33, 1
        %s466 = scalar_lea.sflag [#allocation10], %s465
        %s467 = sand.u32 %s93, 1
        %s468 = smul.addr %s467, 16
        %s469 = scalar_lea.vmem [#allocation11], %s468
        // Predicated region
        $region73: #{tpu_custom_call.1} parent=63 // pred_check
          %p470 = pneg %p106
        $region74: #{tpu_custom_call.1} parent=63 // pred_check_branch
          %472 = sbr.rel (%p470) target = $region76
        $region75: #{tpu_custom_call.1} parent=63 // pred_region
          %473 = dma.done %s466, 256
        $region76: #{tpu_custom_call.1} parent=63 // pred_fallthru
          _
        // Predicated region
        $region77: #{tpu_custom_call.1} parent=63 // pred_check
          %p474 = pneg %p127
        $region78: #{tpu_custom_call.1} parent=63 // pred_check_branch
          %476 = sbr.rel (%p474) target = $region80
        $region79: #{tpu_custom_call.1} parent=63 // pred_region
          %477 = dma.done [#allocation13], 8192
        $region80: #{tpu_custom_call.1} parent=63 // pred_fallthru
          _
        // Predicated region
        $region81: #{tpu_custom_call.1} parent=63 // pred_check
          %p478 = pneg %p169
        $region82: #{tpu_custom_call.1} parent=63 // pred_check_branch
          %480 = sbr.rel (%p478) target = $region84
        $region83: #{tpu_custom_call.1} parent=63 // pred_region
          %481 = dma.done [#allocation13], 8192
        $region84: #{tpu_custom_call.1} parent=63 // pred_fallthru
          _
        // Predicated region
        $region85: #{tpu_custom_call.1} parent=63 // pred_check
          %p482 = pneg %p211
        $region86: #{tpu_custom_call.1} parent=63 // pred_check_branch
          %484 = sbr.rel (%p482) target = $region88
        $region87: #{tpu_custom_call.1} parent=63 // pred_region
          %485 = dma.done [#allocation16], 8192
        $region88: #{tpu_custom_call.1} parent=63 // pred_fallthru
          _
        // Predicated region
        $region89: #{tpu_custom_call.1} parent=63 // pred_check
          %p486 = pneg %p253
        $region90: #{tpu_custom_call.1} parent=63 // pred_check_branch
          %488 = sbr.rel (%p486) target = $region92
        $region91: #{tpu_custom_call.1} parent=63 // pred_region
          %489 = dma.done [#allocation16], 8192
        $region92: #{tpu_custom_call.1} parent=63 // pred_fallthru
          _
        %s490 = sand.u32 %s41, 1
        %s491 = scalar_lea.sflag [#allocation7], %s490
        %s492 = sand.u32 %s41, 1
        %s493 = smul.addr %s492, 16
        %s494 = scalar_lea.vmem [#allocation6], %s493
        %p495 = pneg %p54
        %p496 = pneg %p51
        %s497 = sand.u32 %s33, 1
        %s498 = scalar_lea.sflag [#allocation10], %s497
        %s499 = sand.u32 %s67, 1
        %s500 = smul.addr %s499, 16
        %s501 = scalar_lea.vmem [#allocation9], %s500
        %p502 = pneg %p80
        %p503 = pneg %p77
        %s504 = sand.u32 %s33, 1
        %s505 = scalar_lea.sflag [#allocation10], %s504
        %s506 = sand.u32 %s93, 1
        %s507 = smul.addr %s506, 16
        %s508 = scalar_lea.vmem [#allocation11], %s507
        %p509 = pneg %p106
        %p510 = pneg %p103
        %p511 = pneg %p127
        %p512 = pneg %p124
        %p513 = pneg %p148
        %p514 = pneg %p145
        %p515 = pneg %p169
        %p516 = pneg %p166
        %p517 = pneg %p190
        %p518 = pneg %p187
        %p519 = pneg %p211
        %p520 = pneg %p208
        %p521 = pneg %p232
        %p522 = pneg %p229
        %p523 = pneg %p253
        %p524 = pneg %p250
        %p525 = pneg %p274
        %p526 = pneg %p271
        %p527 = pneg %p300
        %p528 = pneg %p297
        %s529 = sand.u32 %s287, 1
        %s530 = scalar_lea.sflag [#allocation8], %s529
        %s531 = sand.u32 %s287, 1
        %s532 = smul.addr %s531, 16
        %s533 = scalar_lea.vmem [#allocation18], %s532
        %v534 = vld [vmem:[%s451] sm:$0xff]
        %v535 = vld [vmem:[%s451 + $0x8] sm:$0xff]
        %v536 = vld [vmem:[%s460] sm:$0xff]
        %v537 = vld [vmem:[%s460 + $0x8] sm:$0xff]
        %v538 = vld [vmem:[%s469] sm:$0xff]
        %v539 = vld [vmem:[%s469 + $0x8] sm:$0xff]
        %v540 = vld [vmem:[#allocation12] sm:$0xff]
        %v541 = vld [vmem:[#allocation12 + $0x8] sm:$0xff]
        %v542 = vld [vmem:[#allocation12 + $0x10] sm:$0xff]
        %v543 = vld [vmem:[#allocation12 + $0x18] sm:$0xff]
        %v544 = vld [vmem:[#allocation12 + $0x20] sm:$0xff]
        %v545 = vld [vmem:[#allocation12 + $0x28] sm:$0xff]
        %v546 = vld [vmem:[#allocation12 + $0x30] sm:$0xff]
        %v547 = vld [vmem:[#allocation12 + $0x38] sm:$0xff]
        %v548 = vld [vmem:[#allocation12 + $0x40] sm:$0xff]
        %v549 = vld [vmem:[#allocation12 + $0x48] sm:$0xff]
        %v550 = vld [vmem:[#allocation12 + $0x50] sm:$0xff]
        %v551 = vld [vmem:[#allocation12 + $0x58] sm:$0xff]
        %v552 = vld [vmem:[#allocation12 + $0x60] sm:$0xff]
        %v553 = vld [vmem:[#allocation12 + $0x68] sm:$0xff]
        %v554 = vld [vmem:[#allocation12 + $0x70] sm:$0xff]
        %v555 = vld [vmem:[#allocation12 + $0x78] sm:$0xff]
        %v556 = vld [vmem:[#allocation12 + $0x80] sm:$0xff]
        %v557 = vld [vmem:[#allocation12 + $0x88] sm:$0xff]
        %v558 = vld [vmem:[#allocation12 + $0x90] sm:$0xff]
        %v559 = vld [vmem:[#allocation12 + $0x98] sm:$0xff]
        %v560 = vld [vmem:[#allocation12 + $0xa0] sm:$0xff]
        %v561 = vld [vmem:[#allocation12 + $0xa8] sm:$0xff]
        %v562 = vld [vmem:[#allocation12 + $0xb0] sm:$0xff]
        %v563 = vld [vmem:[#allocation12 + $0xb8] sm:$0xff]
        %v564 = vld [vmem:[#allocation12 + $0xc0] sm:$0xff]
        %v565 = vld [vmem:[#allocation12 + $0xc8] sm:$0xff]
        %v566 = vld [vmem:[#allocation12 + $0xd0] sm:$0xff]
        %v567 = vld [vmem:[#allocation12 + $0xd8] sm:$0xff]
        %v568 = vld [vmem:[#allocation12 + $0xe0] sm:$0xff]
        %v569 = vld [vmem:[#allocation12 + $0xe8] sm:$0xff]
        %v570 = vld [vmem:[#allocation12 + $0xf0] sm:$0xff]
        %v571 = vld [vmem:[#allocation12 + $0xf8] sm:$0xff]
        %v572 = vld [vmem:[#allocation12 + $0x100] sm:$0xff]
        %v573 = vld [vmem:[#allocation12 + $0x108] sm:$0xff]
        %v574 = vld [vmem:[#allocation12 + $0x110] sm:$0xff]
        %v575 = vld [vmem:[#allocation12 + $0x118] sm:$0xff]
        %v576 = vld [vmem:[#allocation12 + $0x120] sm:$0xff]
        %v577 = vld [vmem:[#allocation12 + $0x128] sm:$0xff]
        %v578 = vld [vmem:[#allocation12 + $0x130] sm:$0xff]
        %v579 = vld [vmem:[#allocation12 + $0x138] sm:$0xff]
        %v580 = vld [vmem:[#allocation12 + $0x140] sm:$0xff]
        %v581 = vld [vmem:[#allocation12 + $0x148] sm:$0xff]
        %v582 = vld [vmem:[#allocation12 + $0x150] sm:$0xff]
        %v583 = vld [vmem:[#allocation12 + $0x158] sm:$0xff]
        %v584 = vld [vmem:[#allocation12 + $0x160] sm:$0xff]
        %v585 = vld [vmem:[#allocation12 + $0x168] sm:$0xff]
        %v586 = vld [vmem:[#allocation12 + $0x170] sm:$0xff]
        %v587 = vld [vmem:[#allocation12 + $0x178] sm:$0xff]
        %v588 = vld [vmem:[#allocation12 + $0x180] sm:$0xff]
        %v589 = vld [vmem:[#allocation12 + $0x188] sm:$0xff]
        %v590 = vld [vmem:[#allocation12 + $0x190] sm:$0xff]
        %v591 = vld [vmem:[#allocation12 + $0x198] sm:$0xff]
        %v592 = vld [vmem:[#allocation12 + $0x1a0] sm:$0xff]
        %v593 = vld [vmem:[#allocation12 + $0x1a8] sm:$0xff]
        %v594 = vld [vmem:[#allocation12 + $0x1b0] sm:$0xff]
        %v595 = vld [vmem:[#allocation12 + $0x1b8] sm:$0xff]
        %v596 = vld [vmem:[#allocation12 + $0x1c0] sm:$0xff]
        %v597 = vld [vmem:[#allocation12 + $0x1c8] sm:$0xff]
        %v598 = vld [vmem:[#allocation12 + $0x1d0] sm:$0xff]
        %v599 = vld [vmem:[#allocation12 + $0x1d8] sm:$0xff]
        %v600 = vld [vmem:[#allocation12 + $0x1e0] sm:$0xff]
        %v601 = vld [vmem:[#allocation12 + $0x1e8] sm:$0xff]
        %v602 = vld [vmem:[#allocation12 + $0x1f0] sm:$0xff]
        %v603 = vld [vmem:[#allocation12 + $0x1f8] sm:$0xff]
        %v604 = vld [vmem:[%s4] sm:$0x3]
        %v606 = vlaneseq
        %v607 = vshrl.u32 %v606, 7
        %v608 = vsub.s32 0, %v607
        %v609 = vrot.slane %v604, %v608
        %v610 = vlaneseq
        %v611 = vshrl.u32 %v610, 7
        %v612 = vsub.s32 1, %v611
        %v613 = vrot.slane %v604, %v612
        %616 = vmatprep.subr.mxu0 %v571
        %617 = vmatpush1.msra.mxu0 %v570
        %618 = vmatprep.subr.mxu0 %v569
        %619 = vmatpush1.msra.mxu0 %v568
        %620 = vmatprep.subr.mxu0 %v567
        %621 = vmatpush1.msra.mxu0 %v566
        %622 = vmatprep.subr.mxu0 %v565
        %623 = vmatpush1.msra.mxu0 %v564
        %624 = vmatprep.subr.mxu0 %v563
        %625 = vmatpush1.msra.mxu0 %v562
        %626 = vmatprep.subr.mxu0 %v561
        %627 = vmatpush1.msra.mxu0 %v560
        %628 = vmatprep.subr.mxu0 %v559
        %629 = vmatpush1.msra.mxu0 %v558
        %630 = vmatprep.subr.mxu0 %v557
        %631 = vmatpush1.msra.mxu0 %v556
        %632 = vmatprep.subr.mxu0 %v555
        %633 = vmatpush1.msra.mxu0 %v554
        %634 = vmatprep.subr.mxu0 %v553
        %635 = vmatpush1.msra.mxu0 %v552
        %636 = vmatprep.subr.mxu0 %v551
        %637 = vmatpush1.msra.mxu0 %v550
        %638 = vmatprep.subr.mxu0 %v549
        %639 = vmatpush1.msra.mxu0 %v548
        %640 = vmatprep.subr.mxu0 %v547
        %641 = vmatpush1.msra.mxu0 %v546
        %642 = vmatprep.subr.mxu0 %v545
        %643 = vmatpush1.msra.mxu0 %v544
        %644 = vmatprep.subr.mxu0 %v543
        %645 = vmatpush1.msra.mxu0 %v542
        %646 = vmatprep.subr.mxu0 %v541
        %647 = vmatpush1.msra.mxu0 %v540
        %648 = vmatprep.subr.mxu0 %v603
        %649 = vmatpush2.msra.mxu0 %v602
        %650 = vmatprep.subr.mxu0 %v601
        %651 = vmatpush2.msra.mxu0 %v600
        %652 = vmatprep.subr.mxu0 %v599
        %653 = vmatpush2.msra.mxu0 %v598
        %654 = vmatprep.subr.mxu0 %v597
        %655 = vmatpush2.msra.mxu0 %v596
        %656 = vmatprep.subr.mxu0 %v595
        %657 = vmatpush2.msra.mxu0 %v594
        %658 = vmatprep.subr.mxu0 %v593
        %659 = vmatpush2.msra.mxu0 %v592
        %660 = vmatprep.subr.mxu0 %v591
        %661 = vmatpush2.msra.mxu0 %v590
        %662 = vmatprep.subr.mxu0 %v589
        %663 = vmatpush2.msra.mxu0 %v588
        %664 = vmatprep.subr.mxu0 %v587
        %665 = vmatpush2.msra.mxu0 %v586
        %666 = vmatprep.subr.mxu0 %v585
        %667 = vmatpush2.msra.mxu0 %v584
        %668 = vmatprep.subr.mxu0 %v583
        %669 = vmatpush2.msra.mxu0 %v582
        %670 = vmatprep.subr.mxu0 %v581
        %671 = vmatpush2.msra.mxu0 %v580
        %672 = vmatprep.subr.mxu0 %v579
        %673 = vmatpush2.msra.mxu0 %v578
        %674 = vmatprep.subr.mxu0 %v577
        %675 = vmatpush2.msra.mxu0 %v576
        %676 = vmatprep.subr.mxu0 %v575
        %677 = vmatpush2.msra.mxu0 %v574
        %678 = vmatprep.subr.mxu0 %v573
        %679 = vmatpush2.msra.mxu0 %v572
        %680 = vmatprep.mubr.f32.mxu0 %v535
        %681 = vmatmul.mubr.f32.gmra.mxu0 %v534
        %v682 = vpop.f32.mrf.mxu0
        %v683 = vadd.f32 %v609, %v682
        %v684 = vpop.f32.mrf.mxu0
        %v685 = vadd.f32 %v613, %v684
        %686 = vdwg.mxu0
        %687 = vst [vmem:[#allocation2] sm:$0xff] %v683
        %688 = vst [vmem:[#allocation2 + $0x8] sm:$0xff] %v685
        %v689 = vld [vmem:[#allocation14] sm:$0xff]
        %v690 = vld [vmem:[#allocation14 + $0x8] sm:$0xff]
        %v691 = vld [vmem:[#allocation14 + $0x10] sm:$0xff]
        %v692 = vld [vmem:[#allocation14 + $0x18] sm:$0xff]
        %v693 = vld [vmem:[#allocation14 + $0x20] sm:$0xff]
        %v694 = vld [vmem:[#allocation14 + $0x28] sm:$0xff]
        %v695 = vld [vmem:[#allocation14 + $0x30] sm:$0xff]
        %v696 = vld [vmem:[#allocation14 + $0x38] sm:$0xff]
        %v697 = vld [vmem:[#allocation14 + $0x40] sm:$0xff]
        %v698 = vld [vmem:[#allocation14 + $0x48] sm:$0xff]
        %v699 = vld [vmem:[#allocation14 + $0x50] sm:$0xff]
        %v700 = vld [vmem:[#allocation14 + $0x58] sm:$0xff]
        %v701 = vld [vmem:[#allocation14 + $0x60] sm:$0xff]
        %v702 = vld [vmem:[#allocation14 + $0x68] sm:$0xff]
        %v703 = vld [vmem:[#allocation14 + $0x70] sm:$0xff]
        %v704 = vld [vmem:[#allocation14 + $0x78] sm:$0xff]
        %v705 = vld [vmem:[#allocation14 + $0x80] sm:$0xff]
        %v706 = vld [vmem:[#allocation14 + $0x88] sm:$0xff]
        %v707 = vld [vmem:[#allocation14 + $0x90] sm:$0xff]
        %v708 = vld [vmem:[#allocation14 + $0x98] sm:$0xff]
        %v709 = vld [vmem:[#allocation14 + $0xa0] sm:$0xff]
        %v710 = vld [vmem:[#allocation14 + $0xa8] sm:$0xff]
        %v711 = vld [vmem:[#allocation14 + $0xb0] sm:$0xff]
        %v712 = vld [vmem:[#allocation14 + $0xb8] sm:$0xff]
        %v713 = vld [vmem:[#allocation14 + $0xc0] sm:$0xff]
        %v714 = vld [vmem:[#allocation14 + $0xc8] sm:$0xff]
        %v715 = vld [vmem:[#allocation14 + $0xd0] sm:$0xff]
        %v716 = vld [vmem:[#allocation14 + $0xd8] sm:$0xff]
        %v717 = vld [vmem:[#allocation14 + $0xe0] sm:$0xff]
        %v718 = vld [vmem:[#allocation14 + $0xe8] sm:$0xff]
        %v719 = vld [vmem:[#allocation14 + $0xf0] sm:$0xff]
        %v720 = vld [vmem:[#allocation14 + $0xf8] sm:$0xff]
        %v721 = vld [vmem:[#allocation14 + $0x100] sm:$0xff]
        %v722 = vld [vmem:[#allocation14 + $0x108] sm:$0xff]
        %v723 = vld [vmem:[#allocation14 + $0x110] sm:$0xff]
        %v724 = vld [vmem:[#allocation14 + $0x118] sm:$0xff]
        %v725 = vld [vmem:[#allocation14 + $0x120] sm:$0xff]
        %v726 = vld [vmem:[#allocation14 + $0x128] sm:$0xff]
        %v727 = vld [vmem:[#allocation14 + $0x130] sm:$0xff]
        %v728 = vld [vmem:[#allocation14 + $0x138] sm:$0xff]
        %v729 = vld [vmem:[#allocation14 + $0x140] sm:$0xff]
        %v730 = vld [vmem:[#allocation14 + $0x148] sm:$0xff]
        %v731 = vld [vmem:[#allocation14 + $0x150] sm:$0xff]
        %v732 = vld [vmem:[#allocation14 + $0x158] sm:$0xff]
        %v733 = vld [vmem:[#allocation14 + $0x160] sm:$0xff]
        %v734 = vld [vmem:[#allocation14 + $0x168] sm:$0xff]
        %v735 = vld [vmem:[#allocation14 + $0x170] sm:$0xff]
        %v736 = vld [vmem:[#allocation14 + $0x178] sm:$0xff]
        %v737 = vld [vmem:[#allocation14 + $0x180] sm:$0xff]
        %v738 = vld [vmem:[#allocation14 + $0x188] sm:$0xff]
        %v739 = vld [vmem:[#allocation14 + $0x190] sm:$0xff]
        %v740 = vld [vmem:[#allocation14 + $0x198] sm:$0xff]
        %v741 = vld [vmem:[#allocation14 + $0x1a0] sm:$0xff]
        %v742 = vld [vmem:[#allocation14 + $0x1a8] sm:$0xff]
        %v743 = vld [vmem:[#allocation14 + $0x1b0] sm:$0xff]
        %v744 = vld [vmem:[#allocation14 + $0x1b8] sm:$0xff]
        %v745 = vld [vmem:[#allocation14 + $0x1c0] sm:$0xff]
        %v746 = vld [vmem:[#allocation14 + $0x1c8] sm:$0xff]
        %v747 = vld [vmem:[#allocation14 + $0x1d0] sm:$0xff]
        %v748 = vld [vmem:[#allocation14 + $0x1d8] sm:$0xff]
        %v749 = vld [vmem:[#allocation14 + $0x1e0] sm:$0xff]
        %v750 = vld [vmem:[#allocation14 + $0x1e8] sm:$0xff]
        %v751 = vld [vmem:[#allocation14 + $0x1f0] sm:$0xff]
        %v752 = vld [vmem:[#allocation14 + $0x1f8] sm:$0xff]
        %v753 = vld [vmem:[%s6] sm:$0x3]
        %v755 = vlaneseq
        %v756 = vshrl.u32 %v755, 7
        %v757 = vsub.s32 0, %v756
        %v758 = vrot.slane %v753, %v757
        %v759 = vlaneseq
        %v760 = vshrl.u32 %v759, 7
        %v761 = vsub.s32 1, %v760
        %v762 = vrot.slane %v753, %v761
        %765 = vmatprep.subr.mxu0 %v720
        %766 = vmatpush1.msra.mxu0 %v719
        %767 = vmatprep.subr.mxu0 %v718
        %768 = vmatpush1.msra.mxu0 %v717
        %769 = vmatprep.subr.mxu0 %v716
        %770 = vmatpush1.msra.mxu0 %v715
        %771 = vmatprep.subr.mxu0 %v714
        %772 = vmatpush1.msra.mxu0 %v713
        %773 = vmatprep.subr.mxu0 %v712
        %774 = vmatpush1.msra.mxu0 %v711
        %775 = vmatprep.subr.mxu0 %v710
        %776 = vmatpush1.msra.mxu0 %v709
        %777 = vmatprep.subr.mxu0 %v708
        %778 = vmatpush1.msra.mxu0 %v707
        %779 = vmatprep.subr.mxu0 %v706
        %780 = vmatpush1.msra.mxu0 %v705
        %781 = vmatprep.subr.mxu0 %v704
        %782 = vmatpush1.msra.mxu0 %v703
        %783 = vmatprep.subr.mxu0 %v702
        %784 = vmatpush1.msra.mxu0 %v701
        %785 = vmatprep.subr.mxu0 %v700
        %786 = vmatpush1.msra.mxu0 %v699
        %787 = vmatprep.subr.mxu0 %v698
        %788 = vmatpush1.msra.mxu0 %v697
        %789 = vmatprep.subr.mxu0 %v696
        %790 = vmatpush1.msra.mxu0 %v695
        %791 = vmatprep.subr.mxu0 %v694
        %792 = vmatpush1.msra.mxu0 %v693
        %793 = vmatprep.subr.mxu0 %v692
        %794 = vmatpush1.msra.mxu0 %v691
        %795 = vmatprep.subr.mxu0 %v690
        %796 = vmatpush1.msra.mxu0 %v689
        %797 = vmatprep.subr.mxu0 %v752
        %798 = vmatpush2.msra.mxu0 %v751
        %799 = vmatprep.subr.mxu0 %v750
        %800 = vmatpush2.msra.mxu0 %v749
        %801 = vmatprep.subr.mxu0 %v748
        %802 = vmatpush2.msra.mxu0 %v747
        %803 = vmatprep.subr.mxu0 %v746
        %804 = vmatpush2.msra.mxu0 %v745
        %805 = vmatprep.subr.mxu0 %v744
        %806 = vmatpush2.msra.mxu0 %v743
        %807 = vmatprep.subr.mxu0 %v742
        %808 = vmatpush2.msra.mxu0 %v741
        %809 = vmatprep.subr.mxu0 %v740
        %810 = vmatpush2.msra.mxu0 %v739
        %811 = vmatprep.subr.mxu0 %v738
        %812 = vmatpush2.msra.mxu0 %v737
        %813 = vmatprep.subr.mxu0 %v736
        %814 = vmatpush2.msra.mxu0 %v735
        %815 = vmatprep.subr.mxu0 %v734
        %816 = vmatpush2.msra.mxu0 %v733
        %817 = vmatprep.subr.mxu0 %v732
        %818 = vmatpush2.msra.mxu0 %v731
        %819 = vmatprep.subr.mxu0 %v730
        %820 = vmatpush2.msra.mxu0 %v729
        %821 = vmatprep.subr.mxu0 %v728
        %822 = vmatpush2.msra.mxu0 %v727
        %823 = vmatprep.subr.mxu0 %v726
        %824 = vmatpush2.msra.mxu0 %v725
        %825 = vmatprep.subr.mxu0 %v724
        %826 = vmatpush2.msra.mxu0 %v723
        %827 = vmatprep.subr.mxu0 %v722
        %828 = vmatpush2.msra.mxu0 %v721
        %829 = vmatprep.mubr.f32.mxu0 %v537
        %830 = vmatmul.mubr.f32.gmra.mxu0 %v536
        %v831 = vpop.f32.mrf.mxu0
        %v832 = vadd.f32 %v758, %v831
        %v833 = vpop.f32.mrf.mxu0
        %v834 = vadd.f32 %v762, %v833
        %835 = vdwg.mxu0
        %836 = vst [vmem:[#allocation3] sm:$0xff] %v832
        %837 = vst [vmem:[#allocation3 + $0x8] sm:$0xff] %v834
        %v838 = vld [vmem:[#allocation15] sm:$0xff]
        %v839 = vld [vmem:[#allocation15 + $0x8] sm:$0xff]
        %v840 = vld [vmem:[#allocation15 + $0x10] sm:$0xff]
        %v841 = vld [vmem:[#allocation15 + $0x18] sm:$0xff]
        %v842 = vld [vmem:[#allocation15 + $0x20] sm:$0xff]
        %v843 = vld [vmem:[#allocation15 + $0x28] sm:$0xff]
        %v844 = vld [vmem:[#allocation15 + $0x30] sm:$0xff]
        %v845 = vld [vmem:[#allocation15 + $0x38] sm:$0xff]
        %v846 = vld [vmem:[#allocation15 + $0x40] sm:$0xff]
        %v847 = vld [vmem:[#allocation15 + $0x48] sm:$0xff]
        %v848 = vld [vmem:[#allocation15 + $0x50] sm:$0xff]
        %v849 = vld [vmem:[#allocation15 + $0x58] sm:$0xff]
        %v850 = vld [vmem:[#allocation15 + $0x60] sm:$0xff]
        %v851 = vld [vmem:[#allocation15 + $0x68] sm:$0xff]
        %v852 = vld [vmem:[#allocation15 + $0x70] sm:$0xff]
        %v853 = vld [vmem:[#allocation15 + $0x78] sm:$0xff]
        %v854 = vld [vmem:[#allocation15 + $0x80] sm:$0xff]
        %v855 = vld [vmem:[#allocation15 + $0x88] sm:$0xff]
        %v856 = vld [vmem:[#allocation15 + $0x90] sm:$0xff]
        %v857 = vld [vmem:[#allocation15 + $0x98] sm:$0xff]
        %v858 = vld [vmem:[#allocation15 + $0xa0] sm:$0xff]
        %v859 = vld [vmem:[#allocation15 + $0xa8] sm:$0xff]
        %v860 = vld [vmem:[#allocation15 + $0xb0] sm:$0xff]
        %v861 = vld [vmem:[#allocation15 + $0xb8] sm:$0xff]
        %v862 = vld [vmem:[#allocation15 + $0xc0] sm:$0xff]
        %v863 = vld [vmem:[#allocation15 + $0xc8] sm:$0xff]
        %v864 = vld [vmem:[#allocation15 + $0xd0] sm:$0xff]
        %v865 = vld [vmem:[#allocation15 + $0xd8] sm:$0xff]
        %v866 = vld [vmem:[#allocation15 + $0xe0] sm:$0xff]
        %v867 = vld [vmem:[#allocation15 + $0xe8] sm:$0xff]
        %v868 = vld [vmem:[#allocation15 + $0xf0] sm:$0xff]
        %v869 = vld [vmem:[#allocation15 + $0xf8] sm:$0xff]
        %v870 = vld [vmem:[#allocation15 + $0x100] sm:$0xff]
        %v871 = vld [vmem:[#allocation15 + $0x108] sm:$0xff]
        %v872 = vld [vmem:[#allocation15 + $0x110] sm:$0xff]
        %v873 = vld [vmem:[#allocation15 + $0x118] sm:$0xff]
        %v874 = vld [vmem:[#allocation15 + $0x120] sm:$0xff]
        %v875 = vld [vmem:[#allocation15 + $0x128] sm:$0xff]
        %v876 = vld [vmem:[#allocation15 + $0x130] sm:$0xff]
        %v877 = vld [vmem:[#allocation15 + $0x138] sm:$0xff]
        %v878 = vld [vmem:[#allocation15 + $0x140] sm:$0xff]
        %v879 = vld [vmem:[#allocation15 + $0x148] sm:$0xff]
        %v880 = vld [vmem:[#allocation15 + $0x150] sm:$0xff]
        %v881 = vld [vmem:[#allocation15 + $0x158] sm:$0xff]
        %v882 = vld [vmem:[#allocation15 + $0x160] sm:$0xff]
        %v883 = vld [vmem:[#allocation15 + $0x168] sm:$0xff]
        %v884 = vld [vmem:[#allocation15 + $0x170] sm:$0xff]
        %v885 = vld [vmem:[#allocation15 + $0x178] sm:$0xff]
        %v886 = vld [vmem:[#allocation15 + $0x180] sm:$0xff]
        %v887 = vld [vmem:[#allocation15 + $0x188] sm:$0xff]
        %v888 = vld [vmem:[#allocation15 + $0x190] sm:$0xff]
        %v889 = vld [vmem:[#allocation15 + $0x198] sm:$0xff]
        %v890 = vld [vmem:[#allocation15 + $0x1a0] sm:$0xff]
        %v891 = vld [vmem:[#allocation15 + $0x1a8] sm:$0xff]
        %v892 = vld [vmem:[#allocation15 + $0x1b0] sm:$0xff]
        %v893 = vld [vmem:[#allocation15 + $0x1b8] sm:$0xff]
        %v894 = vld [vmem:[#allocation15 + $0x1c0] sm:$0xff]
        %v895 = vld [vmem:[#allocation15 + $0x1c8] sm:$0xff]
        %v896 = vld [vmem:[#allocation15 + $0x1d0] sm:$0xff]
        %v897 = vld [vmem:[#allocation15 + $0x1d8] sm:$0xff]
        %v898 = vld [vmem:[#allocation15 + $0x1e0] sm:$0xff]
        %v899 = vld [vmem:[#allocation15 + $0x1e8] sm:$0xff]
        %v900 = vld [vmem:[#allocation15 + $0x1f0] sm:$0xff]
        %v901 = vld [vmem:[#allocation15 + $0x1f8] sm:$0xff]
        %v902 = vld [vmem:[%s8] sm:$0x3]
        %v904 = vlaneseq
        %v905 = vshrl.u32 %v904, 7
        %v906 = vsub.s32 0, %v905
        %v907 = vrot.slane %v902, %v906
        %v908 = vlaneseq
        %v909 = vshrl.u32 %v908, 7
        %v910 = vsub.s32 1, %v909
        %v911 = vrot.slane %v902, %v910
        %914 = vmatprep.subr.mxu0 %v869
        %915 = vmatpush1.msra.mxu0 %v868
        %916 = vmatprep.subr.mxu0 %v867
        %917 = vmatpush1.msra.mxu0 %v866
        %918 = vmatprep.subr.mxu0 %v865
        %919 = vmatpush1.msra.mxu0 %v864
        %920 = vmatprep.subr.mxu0 %v863
        %921 = vmatpush1.msra.mxu0 %v862
        %922 = vmatprep.subr.mxu0 %v861
        %923 = vmatpush1.msra.mxu0 %v860
        %924 = vmatprep.subr.mxu0 %v859
        %925 = vmatpush1.msra.mxu0 %v858
        %926 = vmatprep.subr.mxu0 %v857
        %927 = vmatpush1.msra.mxu0 %v856
        %928 = vmatprep.subr.mxu0 %v855
        %929 = vmatpush1.msra.mxu0 %v854
        %930 = vmatprep.subr.mxu0 %v853
        %931 = vmatpush1.msra.mxu0 %v852
        %932 = vmatprep.subr.mxu0 %v851
        %933 = vmatpush1.msra.mxu0 %v850
        %934 = vmatprep.subr.mxu0 %v849
        %935 = vmatpush1.msra.mxu0 %v848
        %936 = vmatprep.subr.mxu0 %v847
        %937 = vmatpush1.msra.mxu0 %v846
        %938 = vmatprep.subr.mxu0 %v845
        %939 = vmatpush1.msra.mxu0 %v844
        %940 = vmatprep.subr.mxu0 %v843
        %941 = vmatpush1.msra.mxu0 %v842
        %942 = vmatprep.subr.mxu0 %v841
        %943 = vmatpush1.msra.mxu0 %v840
        %944 = vmatprep.subr.mxu0 %v839
        %945 = vmatpush1.msra.mxu0 %v838
        %946 = vmatprep.subr.mxu0 %v901
        %947 = vmatpush2.msra.mxu0 %v900
        %948 = vmatprep.subr.mxu0 %v899
        %949 = vmatpush2.msra.mxu0 %v898
        %950 = vmatprep.subr.mxu0 %v897
        %951 = vmatpush2.msra.mxu0 %v896
        %952 = vmatprep.subr.mxu0 %v895
        %953 = vmatpush2.msra.mxu0 %v894
        %954 = vmatprep.subr.mxu0 %v893
        %955 = vmatpush2.msra.mxu0 %v892
        %956 = vmatprep.subr.mxu0 %v891
        %957 = vmatpush2.msra.mxu0 %v890
        %958 = vmatprep.subr.mxu0 %v889
        %959 = vmatpush2.msra.mxu0 %v888
        %960 = vmatprep.subr.mxu0 %v887
        %961 = vmatpush2.msra.mxu0 %v886
        %962 = vmatprep.subr.mxu0 %v885
        %963 = vmatpush2.msra.mxu0 %v884
        %964 = vmatprep.subr.mxu0 %v883
        %965 = vmatpush2.msra.mxu0 %v882
        %966 = vmatprep.subr.mxu0 %v881
        %967 = vmatpush2.msra.mxu0 %v880
        %968 = vmatprep.subr.mxu0 %v879
        %969 = vmatpush2.msra.mxu0 %v878
        %970 = vmatprep.subr.mxu0 %v877
        %971 = vmatpush2.msra.mxu0 %v876
        %972 = vmatprep.subr.mxu0 %v875
        %973 = vmatpush2.msra.mxu0 %v874
        %974 = vmatprep.subr.mxu0 %v873
        %975 = vmatpush2.msra.mxu0 %v872
        %976 = vmatprep.subr.mxu0 %v871
        %977 = vmatpush2.msra.mxu0 %v870
        %978 = vmatprep.mubr.f32.mxu0 %v539
        %979 = vmatmul.mubr.f32.gmra.mxu0 %v538
        %v980 = vpop.f32.mrf.mxu0
        %v981 = vadd.f32 %v907, %v980
        %v982 = vpop.f32.mrf.mxu0
        %v983 = vadd.f32 %v911, %v982
        %984 = vdwg.mxu0
        %985 = vst [vmem:[#allocation4] sm:$0xff] %v981
        %986 = vst [vmem:[#allocation4 + $0x8] sm:$0xff] %v983
        loop: start=0, step=1, limit=2
        $region93: #{tpu_custom_call.1} parent=63 // loop_pre_header
          _
        $region94: #{tpu_custom_call.1} parent=63 // loop_header
          %s988 = sphi 0, %s992
          %p989 = scmp.ge.s32.totalorder %s988, 2
        $region95: #{tpu_custom_call.1} parent=63 // loop_header_branch
          %991 = sbr.rel (%p989) target = $region99
        $region96: #{tpu_custom_call.1} parent=63 // loop_body
          %s993 = smul.u32 %s988, 128
          %s994 = sshra.s32 %s993, 7
          %s995 = sand.u32 %s993, 127
          %s996 = smul.addr %s994, 8
          %s997 = scalar_lea.vmem [#allocation2], %s996
          %v998 = vld [vmem:[%s997] sm:$0xff]
          %s999 = smul.u32 0, 2
          %s1000 = sadd.s32 %s994, %s999
          %s1001 = smul.addr %s1000, 8
          %s1002 = scalar_lea.vmem [#allocation3], %s1001
          %v1003 = vld [vmem:[%s1002] sm:$0xff]
          %s1004 = smul.addr %s1000, 8
          %s1005 = scalar_lea.vmem [#allocation4], %s1004
          %v1006 = vld [vmem:[%s1005] sm:$0xff]
          %1007 = vmatprep.subr.mxu0 0.0
          %1008 = vmatpush1.xpose.msra.mxu0 0.0
          %1009 = vmatprep.subr.mxu0 0.0
          %1010 = vmatpush1.xpose.msra.mxu0 0.0
          %1011 = vmatprep.subr.mxu0 0.0
          %1012 = vmatpush1.xpose.msra.mxu0 0.0
          %1013 = vmatprep.subr.mxu0 0.0
          %1014 = vmatpush1.xpose.msra.mxu0 0.0
          %1015 = vmatprep.subr.mxu0 0.0
          %1016 = vmatpush1.xpose.msra.mxu0 0.0
          %1017 = vmatprep.subr.mxu0 0.0
          %1018 = vmatpush1.xpose.msra.mxu0 0.0
          %1019 = vmatprep.subr.mxu0 0.0
          %1020 = vmatpush1.xpose.msra.mxu0 0.0
          %1021 = vmatprep.subr.mxu0 0.0
          %1022 = vmatpush1.xpose.msra.mxu0 0.0
          %1023 = vmatprep.subr.mxu0 0.0
          %1024 = vmatpush1.xpose.msra.mxu0 0.0
          %1025 = vmatprep.subr.mxu0 0.0
          %1026 = vmatpush1.xpose.msra.mxu0 0.0
          %1027 = vmatprep.subr.mxu0 0.0
          %1028 = vmatpush1.xpose.msra.mxu0 0.0
          %1029 = vmatprep.subr.mxu0 0.0
          %1030 = vmatpush1.xpose.msra.mxu0 0.0
          %1031 = vmatprep.subr.mxu0 0.0
          %1032 = vmatpush1.xpose.msra.mxu0 0.0
          %1033 = vmatprep.subr.mxu0 0.0
          %1034 = vmatpush1.xpose.msra.mxu0 0.0
          %1035 = vmatprep.subr.mxu0 0.0
          %1036 = vmatpush1.xpose.msra.mxu0 0.0
          %1037 = vmatprep.subr.mxu0 0.0
          %1038 = vmatpush1.xpose.msra.mxu0 %v1003
          %1039 = vmatprep.subr.mxu0 0.0
          %1040 = vmatpush2.xpose.msra.mxu0 0.0
          %1041 = vmatprep.subr.mxu0 0.0
          %1042 = vmatpush2.xpose.msra.mxu0 0.0
          %1043 = vmatprep.subr.mxu0 0.0
          %1044 = vmatpush2.xpose.msra.mxu0 0.0
          %1045 = vmatprep.subr.mxu0 0.0
          %1046 = vmatpush2.xpose.msra.mxu0 0.0
          %1047 = vmatprep.subr.mxu0 0.0
          %1048 = vmatpush2.xpose.msra.mxu0 0.0
          %1049 = vmatprep.subr.mxu0 0.0
          %1050 = vmatpush2.xpose.msra.mxu0 0.0
          %1051 = vmatprep.subr.mxu0 0.0
          %1052 = vmatpush2.xpose.msra.mxu0 0.0
          %1053 = vmatprep.subr.mxu0 0.0
          %1054 = vmatpush2.xpose.msra.mxu0 0.0
          %1055 = vmatprep.subr.mxu0 0.0
          %1056 = vmatpush2.xpose.msra.mxu0 0.0
          %1057 = vmatprep.subr.mxu0 0.0
          %1058 = vmatpush2.xpose.msra.mxu0 0.0
          %1059 = vmatprep.subr.mxu0 0.0
          %1060 = vmatpush2.xpose.msra.mxu0 0.0
          %1061 = vmatprep.subr.mxu0 0.0
          %1062 = vmatpush2.xpose.msra.mxu0 0.0
          %1063 = vmatprep.subr.mxu0 0.0
          %1064 = vmatpush2.xpose.msra.mxu0 0.0
          %1065 = vmatprep.subr.mxu0 0.0
          %1066 = vmatpush2.xpose.msra.mxu0 0.0
          %1067 = vmatprep.subr.mxu0 0.0
          %1068 = vmatpush2.xpose.msra.mxu0 0.0
          %1069 = vmatprep.subr.mxu0 0.0
          %1070 = vmatpush2.xpose.msra.mxu0 0.0
          %1071 = vmatprep.mubr.f32.mxu0 0.0
          %1072 = vmatmul.mubr.f32.gmra.mxu0 %v998
          %v1073 = vpop.f32.mrf.mxu0
          %v1074 = vadd.f32 0.0, %v1073
          %v1075 = vpop.f32.mrf.mxu0
          %1076 = vdwg.mxu0
          %vm1077 = vcmask 64512
          %v1078 = vsel %vm1077, %v1074, -inf
          %1079 = vmax.xlane.f32.xlu0 %v1078
          %v1080 = vpop.xlane.xlu0 %1079
          %v1081 = vsub.f32 -inf, %v1080
          %v1082 = vmul.f32 %v1081, 1.442695
          %v1083 = vpow.pop %v1082
          %v1084 = vsub.f32 %v1074, %v1080
          %v1085 = vmul.f32 %v1084, 1.442695
          %v1086 = vpow.pop %v1085
          %v1087 = vmul.f32 %v1083, 0.0
          %v1088 = vsel %vm1077, %v1086, 0.0
          %1089 = vadd.xlane.f32.xlu0 %v1088
          %v1090 = vpop.xlane.xlu0 %1089
          %v1091 = vadd.f32 %v1087, %v1090
          %v1093 = vsel %vm1077, %v1086, 0
          %1095 = vmatprep.subr.mxu0 0.0
          %1096 = vmatpush1.msra.mxu0 0.0
          %1097 = vmatprep.subr.mxu0 0.0
          %1098 = vmatpush1.msra.mxu0 0.0
          %1099 = vmatprep.subr.mxu0 0.0
          %1100 = vmatpush1.msra.mxu0 0.0
          %1101 = vmatprep.subr.mxu0 0.0
          %1102 = vmatpush1.msra.mxu0 0.0
          %1103 = vmatprep.subr.mxu0 0.0
          %1104 = vmatpush1.msra.mxu0 0.0
          %1105 = vmatprep.subr.mxu0 0.0
          %1106 = vmatpush1.msra.mxu0 0.0
          %1107 = vmatprep.subr.mxu0 0.0
          %1108 = vmatpush1.msra.mxu0 0.0
          %1109 = vmatprep.subr.mxu0 0.0
          %1110 = vmatpush1.msra.mxu0 0.0
          %1111 = vmatprep.subr.mxu0 0.0
          %1112 = vmatpush1.msra.mxu0 0.0
          %1113 = vmatprep.subr.mxu0 0.0
          %1114 = vmatpush1.msra.mxu0 0.0
          %1115 = vmatprep.subr.mxu0 0.0
          %1116 = vmatpush1.msra.mxu0 0.0
          %1117 = vmatprep.subr.mxu0 0.0
          %1118 = vmatpush1.msra.mxu0 0.0
          %1119 = vmatprep.subr.mxu0 0.0
          %1120 = vmatpush1.msra.mxu0 0.0
          %1121 = vmatprep.subr.mxu0 0.0
          %1122 = vmatpush1.msra.mxu0 0.0
          %1123 = vmatprep.subr.mxu0 0.0
          %1124 = vmatpush1.msra.mxu0 0.0
          %1125 = vmatprep.subr.mxu0 0.0
          %1126 = vmatpush1.msra.mxu0 %v1006
          %1127 = vmatprep.subr.mxu0 0.0
          %1128 = vmatpush2.msra.mxu0 0.0
          %1129 = vmatprep.subr.mxu0 0.0
          %1130 = vmatpush2.msra.mxu0 0.0
          %1131 = vmatprep.subr.mxu0 0.0
          %1132 = vmatpush2.msra.mxu0 0.0
          %1133 = vmatprep.subr.mxu0 0.0
          %1134 = vmatpush2.msra.mxu0 0.0
          %1135 = vmatprep.subr.mxu0 0.0
          %1136 = vmatpush2.msra.mxu0 0.0
          %1137 = vmatprep.subr.mxu0 0.0
          %1138 = vmatpush2.msra.mxu0 0.0
          %1139 = vmatprep.subr.mxu0 0.0
          %1140 = vmatpush2.msra.mxu0 0.0
          %1141 = vmatprep.subr.mxu0 0.0
          %1142 = vmatpush2.msra.mxu0 0.0
          %1143 = vmatprep.subr.mxu0 0.0
          %1144 = vmatpush2.msra.mxu0 0.0
          %1145 = vmatprep.subr.mxu0 0.0
          %1146 = vmatpush2.msra.mxu0 0.0
          %1147 = vmatprep.subr.mxu0 0.0
          %1148 = vmatpush2.msra.mxu0 0.0
          %1149 = vmatprep.subr.mxu0 0.0
          %1150 = vmatpush2.msra.mxu0 0.0
          %1151 = vmatprep.subr.mxu0 0.0
          %1152 = vmatpush2.msra.mxu0 0.0
          %1153 = vmatprep.subr.mxu0 0.0
          %1154 = vmatpush2.msra.mxu0 0.0
          %1155 = vmatprep.subr.mxu0 0.0
          %1156 = vmatpush2.msra.mxu0 0.0
          %1157 = vmatprep.subr.mxu0 0.0
          %1158 = vmatpush2.msra.mxu0 0.0
          %1159 = vmatprep.mubr.f32.mxu0 0.0
          %1160 = vmatmul.mubr.f32.gmra.mxu0 %v1093
          %v1161 = vpop.f32.mrf.mxu0
          %v1162 = vadd.f32 0.0, %v1161
          %v1163 = vpop.f32.mrf.mxu0
          %1164 = vdwg.mxu0
          %v1165 = vadd.f32 %v1087, %v1162
          %v1166 = vrcp.pop %v1091
          %v1167 = vmul.f32 1.0, %v1166
          %v1168 = vmul.f32 %v1165, %v1167
          %s1169 = smul.addr %s994, 8
          %s1170 = scalar_lea.vmem [#allocation5], %s1169
          %1171 = vst [vmem:[%s1170] sm:$0xff] %v1168
        $region97: #{tpu_custom_call.1} parent=63 // loop_footer
          %s992 = sadd.s32 1, %s988
        $region98: #{tpu_custom_call.1} parent=63 // loop_footer_branch
          %987 = sbr.rel target = $region94
        $region99: #{tpu_custom_call.1} parent=63 // loop_exit
          _
        %v1172 = vld [vmem:[#allocation5] sm:$0xff]
        %v1173 = vld [vmem:[#allocation5 + $0x8] sm:$0xff]
        %v1174 = vld [vmem:[#allocation17] sm:$0xff]
        %v1175 = vld [vmem:[#allocation17 + $0x8] sm:$0xff]
        %v1176 = vld [vmem:[#allocation17 + $0x10] sm:$0xff]
        %v1177 = vld [vmem:[#allocation17 + $0x18] sm:$0xff]
        %v1178 = vld [vmem:[#allocation17 + $0x20] sm:$0xff]
        %v1179 = vld [vmem:[#allocation17 + $0x28] sm:$0xff]
        %v1180 = vld [vmem:[#allocation17 + $0x30] sm:$0xff]
        %v1181 = vld [vmem:[#allocation17 + $0x38] sm:$0xff]
        %v1182 = vld [vmem:[#allocation17 + $0x40] sm:$0xff]
        %v1183 = vld [vmem:[#allocation17 + $0x48] sm:$0xff]
        %v1184 = vld [vmem:[#allocation17 + $0x50] sm:$0xff]
        %v1185 = vld [vmem:[#allocation17 + $0x58] sm:$0xff]
        %v1186 = vld [vmem:[#allocation17 + $0x60] sm:$0xff]
        %v1187 = vld [vmem:[#allocation17 + $0x68] sm:$0xff]
        %v1188 = vld [vmem:[#allocation17 + $0x70] sm:$0xff]
        %v1189 = vld [vmem:[#allocation17 + $0x78] sm:$0xff]
        %v1190 = vld [vmem:[#allocation17 + $0x80] sm:$0xff]
        %v1191 = vld [vmem:[#allocation17 + $0x88] sm:$0xff]
        %v1192 = vld [vmem:[#allocation17 + $0x90] sm:$0xff]
        %v1193 = vld [vmem:[#allocation17 + $0x98] sm:$0xff]
        %v1194 = vld [vmem:[#allocation17 + $0xa0] sm:$0xff]
        %v1195 = vld [vmem:[#allocation17 + $0xa8] sm:$0xff]
        %v1196 = vld [vmem:[#allocation17 + $0xb0] sm:$0xff]
        %v1197 = vld [vmem:[#allocation17 + $0xb8] sm:$0xff]
        %v1198 = vld [vmem:[#allocation17 + $0xc0] sm:$0xff]
        %v1199 = vld [vmem:[#allocation17 + $0xc8] sm:$0xff]
        %v1200 = vld [vmem:[#allocation17 + $0xd0] sm:$0xff]
        %v1201 = vld [vmem:[#allocation17 + $0xd8] sm:$0xff]
        %v1202 = vld [vmem:[#allocation17 + $0xe0] sm:$0xff]
        %v1203 = vld [vmem:[#allocation17 + $0xe8] sm:$0xff]
        %v1204 = vld [vmem:[#allocation17 + $0xf0] sm:$0xff]
        %v1205 = vld [vmem:[#allocation17 + $0xf8] sm:$0xff]
        %v1206 = vld [vmem:[#allocation17 + $0x100] sm:$0xff]
        %v1207 = vld [vmem:[#allocation17 + $0x108] sm:$0xff]
        %v1208 = vld [vmem:[#allocation17 + $0x110] sm:$0xff]
        %v1209 = vld [vmem:[#allocation17 + $0x118] sm:$0xff]
        %v1210 = vld [vmem:[#allocation17 + $0x120] sm:$0xff]
        %v1211 = vld [vmem:[#allocation17 + $0x128] sm:$0xff]
        %v1212 = vld [vmem:[#allocation17 + $0x130] sm:$0xff]
        %v1213 = vld [vmem:[#allocation17 + $0x138] sm:$0xff]
        %v1214 = vld [vmem:[#allocation17 + $0x140] sm:$0xff]
        %v1215 = vld [vmem:[#allocation17 + $0x148] sm:$0xff]
        %v1216 = vld [vmem:[#allocation17 + $0x150] sm:$0xff]
        %v1217 = vld [vmem:[#allocation17 + $0x158] sm:$0xff]
        %v1218 = vld [vmem:[#allocation17 + $0x160] sm:$0xff]
        %v1219 = vld [vmem:[#allocation17 + $0x168] sm:$0xff]
        %v1220 = vld [vmem:[#allocation17 + $0x170] sm:$0xff]
        %v1221 = vld [vmem:[#allocation17 + $0x178] sm:$0xff]
        %v1222 = vld [vmem:[#allocation17 + $0x180] sm:$0xff]
        %v1223 = vld [vmem:[#allocation17 + $0x188] sm:$0xff]
        %v1224 = vld [vmem:[#allocation17 + $0x190] sm:$0xff]
        %v1225 = vld [vmem:[#allocation17 + $0x198] sm:$0xff]
        %v1226 = vld [vmem:[#allocation17 + $0x1a0] sm:$0xff]
        %v1227 = vld [vmem:[#allocation17 + $0x1a8] sm:$0xff]
        %v1228 = vld [vmem:[#allocation17 + $0x1b0] sm:$0xff]
        %v1229 = vld [vmem:[#allocation17 + $0x1b8] sm:$0xff]
        %v1230 = vld [vmem:[#allocation17 + $0x1c0] sm:$0xff]
        %v1231 = vld [vmem:[#allocation17 + $0x1c8] sm:$0xff]
        %v1232 = vld [vmem:[#allocation17 + $0x1d0] sm:$0xff]
        %v1233 = vld [vmem:[#allocation17 + $0x1d8] sm:$0xff]
        %v1234 = vld [vmem:[#allocation17 + $0x1e0] sm:$0xff]
        %v1235 = vld [vmem:[#allocation17 + $0x1e8] sm:$0xff]
        %v1236 = vld [vmem:[#allocation17 + $0x1f0] sm:$0xff]
        %v1237 = vld [vmem:[#allocation17 + $0x1f8] sm:$0xff]
        %v1238 = vld [vmem:[%s10] sm:$0x3]
        %v1240 = vlaneseq
        %v1241 = vshrl.u32 %v1240, 7
        %v1242 = vsub.s32 0, %v1241
        %v1243 = vrot.slane %v1238, %v1242
        %v1244 = vlaneseq
        %v1245 = vshrl.u32 %v1244, 7
        %v1246 = vsub.s32 1, %v1245
        %v1247 = vrot.slane %v1238, %v1246
        %1250 = vmatprep.subr.mxu0 %v1205
        %1251 = vmatpush1.msra.mxu0 %v1204
        %1252 = vmatprep.subr.mxu0 %v1203
        %1253 = vmatpush1.msra.mxu0 %v1202
        %1254 = vmatprep.subr.mxu0 %v1201
        %1255 = vmatpush1.msra.mxu0 %v1200
        %1256 = vmatprep.subr.mxu0 %v1199
        %1257 = vmatpush1.msra.mxu0 %v1198
        %1258 = vmatprep.subr.mxu0 %v1197
        %1259 = vmatpush1.msra.mxu0 %v1196
        %1260 = vmatprep.subr.mxu0 %v1195
        %1261 = vmatpush1.msra.mxu0 %v1194
        %1262 = vmatprep.subr.mxu0 %v1193
        %1263 = vmatpush1.msra.mxu0 %v1192
        %1264 = vmatprep.subr.mxu0 %v1191
        %1265 = vmatpush1.msra.mxu0 %v1190
        %1266 = vmatprep.subr.mxu0 %v1189
        %1267 = vmatpush1.msra.mxu0 %v1188
        %1268 = vmatprep.subr.mxu0 %v1187
        %1269 = vmatpush1.msra.mxu0 %v1186
        %1270 = vmatprep.subr.mxu0 %v1185
        %1271 = vmatpush1.msra.mxu0 %v1184
        %1272 = vmatprep.subr.mxu0 %v1183
        %1273 = vmatpush1.msra.mxu0 %v1182
        %1274 = vmatprep.subr.mxu0 %v1181
        %1275 = vmatpush1.msra.mxu0 %v1180
        %1276 = vmatprep.subr.mxu0 %v1179
        %1277 = vmatpush1.msra.mxu0 %v1178
        %1278 = vmatprep.subr.mxu0 %v1177
        %1279 = vmatpush1.msra.mxu0 %v1176
        %1280 = vmatprep.subr.mxu0 %v1175
        %1281 = vmatpush1.msra.mxu0 %v1174
        %1282 = vmatprep.subr.mxu0 %v1237
        %1283 = vmatpush2.msra.mxu0 %v1236
        %1284 = vmatprep.subr.mxu0 %v1235
        %1285 = vmatpush2.msra.mxu0 %v1234
        %1286 = vmatprep.subr.mxu0 %v1233
        %1287 = vmatpush2.msra.mxu0 %v1232
        %1288 = vmatprep.subr.mxu0 %v1231
        %1289 = vmatpush2.msra.mxu0 %v1230
        %1290 = vmatprep.subr.mxu0 %v1229
        %1291 = vmatpush2.msra.mxu0 %v1228
        %1292 = vmatprep.subr.mxu0 %v1227
        %1293 = vmatpush2.msra.mxu0 %v1226
        %1294 = vmatprep.subr.mxu0 %v1225
        %1295 = vmatpush2.msra.mxu0 %v1224
        %1296 = vmatprep.subr.mxu0 %v1223
        %1297 = vmatpush2.msra.mxu0 %v1222
        %1298 = vmatprep.subr.mxu0 %v1221
        %1299 = vmatpush2.msra.mxu0 %v1220
        %1300 = vmatprep.subr.mxu0 %v1219
        %1301 = vmatpush2.msra.mxu0 %v1218
        %1302 = vmatprep.subr.mxu0 %v1217
        %1303 = vmatpush2.msra.mxu0 %v1216
        %1304 = vmatprep.subr.mxu0 %v1215
        %1305 = vmatpush2.msra.mxu0 %v1214
        %1306 = vmatprep.subr.mxu0 %v1213
        %1307 = vmatpush2.msra.mxu0 %v1212
        %1308 = vmatprep.subr.mxu0 %v1211
        %1309 = vmatpush2.msra.mxu0 %v1210
        %1310 = vmatprep.subr.mxu0 %v1209
        %1311 = vmatpush2.msra.mxu0 %v1208
        %1312 = vmatprep.subr.mxu0 %v1207
        %1313 = vmatpush2.msra.mxu0 %v1206
        %1314 = vmatprep.mubr.f32.mxu0 %v1173
        %1315 = vmatmul.mubr.f32.gmra.mxu0 %v1172
        %v1316 = vpop.f32.mrf.mxu0
        %v1317 = vadd.f32 %v1243, %v1316
        %v1318 = vpop.f32.mrf.mxu0
        %v1319 = vadd.f32 %v1247, %v1318
        %1320 = vdwg.mxu0
        %1321 = vst [vmem:[%s533] sm:$0xff] %v1317
        %1322 = vst [vmem:[%s533 + $0x8] sm:$0xff] %v1319
        %s1323 = sand.u32 %s287, 1
        %s1324 = scalar_lea.sflag [#allocation8], %s1323
        %s1325 = sand.u32 %s287, 1
        %s1326 = smul.addr %s1325, 16
        %s1327 = scalar_lea.vmem [#allocation18], %s1326
        // Predicated region
        $region100: #{tpu_custom_call.1} parent=63 // pred_check
          %p1328 = pneg %p297
        $region101: #{tpu_custom_call.1} parent=63 // pred_check_branch
          %1330 = sbr.rel (%p1328) target = $region103
        $region102: #{tpu_custom_call.1} parent=63 // pred_region
          %s1332 = ssub.s32 256, 256
          %1333 = vsyncadd %s1324, %s1332
          %s1334 = smul.addr %s33, 2
          %s1335 = smul.addr %s1334, 128
          %s1336 = scalar_lea.hbm %s11, %s1335
          %s1338 = sshll.u32 %s1327, 4
          %s1339 = int_to_ptr.vmem [resolvable:$true] %s1338
          %1341 = dma.vmem_to_hbm [thread:$0]  %s1339, 256, %s1336, %s1324
        $region103: #{tpu_custom_call.1} parent=63 // pred_fallthru
          _
      $region64: #{tpu_custom_call.1} parent=5 // pred_fallthru
        _
      %p1342 = scmp.le.s32.totalorder 2, %s28
      // Predicated region
      $region104: #{tpu_custom_call.1} parent=5 // pred_check
        %p1343 = pneg %p1342
      $region105: #{tpu_custom_call.1} parent=5 // pred_check_branch
        %1345 = sbr.rel (%p1343) target = $region107
      $region106: #{tpu_custom_call.1} parent=5 // pred_region
        %s1346 = ssub.s32 %s28, 2
        // Predicated region
        $region108: #{tpu_custom_call.1} parent=106 // pred_check
          %p1347 = pneg %p303
        $region109: #{tpu_custom_call.1} parent=106 // pred_check_branch
          %1349 = sbr.rel (%p1347) target = $region111
        $region110: #{tpu_custom_call.1} parent=106 // pred_region
          %s1350 = sand.u32 %s288, 1
          %s1351 = scalar_lea.sflag [#allocation8], %s1350
          %s1352 = sand.u32 %s288, 1
          %s1353 = smul.addr %s1352, 16
          %s1354 = scalar_lea.vmem [#allocation18], %s1353
          %1355 = dma.done %s1351, 256
        $region111: #{tpu_custom_call.1} parent=106 // pred_fallthru
          _
      $region107: #{tpu_custom_call.1} parent=5 // pred_fallthru
        _
    $region6: #{tpu_custom_call.1} parent=1 // loop_footer
      %s32 = sadd.s32 1, %s28
    $region7: #{tpu_custom_call.1} parent=1 // loop_footer_branch
      %27 = sbr.rel target = $region3
    $region8: #{tpu_custom_call.1} parent=1 // loop_exit
      _
    %1356 = vsyncpa [#allocation7], 1
    %s1357 = scalar_lea.sflag [#allocation7], 1
    %1358 = vsyncpa %s1357, 1
    %1359 = vsyncpa [#allocation10], 1
    %s1360 = scalar_lea.sflag [#allocation10], 1
    %1361 = vsyncpa %s1360, 1
    %1362 = vsyncpa [#allocation13], 1
    %1363 = vsyncpa [#allocation16], 1
    %1364 = vsyncpa [#allocation8], 1
    %s1365 = scalar_lea.sflag [#allocation8], 1
    %1366 = vsyncpa %s1365, 1

</llo_original>
